<compile_context>
chip_gen: v7x
topology: tpu7x:2x2x1
jax: 0.10.0
libtpu: 0.0.40
codegen_flags: <defaults>
</compile_context>

<pallas_src>
import functools

import jax
import jax.numpy as jnp
from jax.experimental import pallas as pl
from jax.experimental.pallas import tpu as pltpu


def _ap_physics_kernel(y_ref, st_ref, o_ref, *, dim_d, par, k, e):
    # y_ref : (TB, 2D)  state tile [u | v]
    # st_ref: (D, D)    S^T (resident in VMEM across the whole grid)
    # o_ref : (TB, 2D)  output tile [pde1 | pde2]
    u = y_ref[:, :dim_d]                                   # (TB, D)
    v = y_ref[:, dim_d:]                                   # (TB, D)
    st = st_ref[...]

    # Diffusion term: (S @ u^T)^T == u @ S^T  -> MXU, f32 accumulation.
    if st.dtype == jnp.float32:
        # Full-precision f32 matmul (matches PyTorch f32 S@u bit-for-bit-ish).
        mk = jnp.dot(u, st, preferred_element_type=jnp.float32,
                     precision=jax.lax.Precision.HIGHEST)
    else:
        # bf16 operands, f32 accumulation (optional fast path for large D).
        mk = jnp.dot(u.astype(st.dtype), st,
                     preferred_element_type=jnp.float32)

    # Reaction terms: pure VPU elementwise work (reuse common subexpressions).
    ku = k * u
    um = u - par
    pde1 = mk + ku * (1.0 - u) * um
    pde2 = -e * (ku * (um - 1.0) + v)

    # cat along the feature axis == two contiguous, lane-aligned half stores.
    o_ref[:, :dim_d] = pde1.astype(o_ref.dtype)
    o_ref[:, dim_d:] = pde2.astype(o_ref.dtype)


def _round_up(x, m):
    return (x + m - 1) // m * m


def ap_model_physics_forward(y, S, par, *, k=8.0, e=0.01,
                             matmul_in_bf16=False, interpret=False):
    """Pallas equivalent of APModelPhysics.forward(t, y); `t` is unused.

    y   : (B, 2*D) float32 state [u | v]
    S   : (D, D)   float32 diffusion / stiffness operator
    par : python float (the Aliev-Panfilov 'a' parameter)
    """
    B, two_d = y.shape
    assert two_d % 2 == 0, two_d
    D = two_d // 2
    assert S.shape == (D, D), S.shape

    # Pre-transpose S once in the wrapper so the kernel sees a standard
    # [K=D, N=D] right operand (no per-step XLU transpose inside the kernel).
    st = jnp.transpose(S)
    if matmul_in_bf16:
        st = st.astype(jnp.bfloat16)
    st_bytes = D * D * jnp.dtype(st.dtype).itemsize

    # --- Batch tile selection -------------------------------------------
    # Target ~2 MiB per (tb, 2D) block to amortize the ~0.35 us/step
    # overhead, at least 256 rows to fill the MXU M dim, at most 2048; then
    # cap so there are >=2 grid steps (keeps both v7x TensorCores busy).
    row_bytes = 2 * D * 4
    tb = _round_up(max((2 * 1024 * 1024) // row_bytes, 1), 8)
    tb = min(max(tb, 256), 2048)
    tb = max(min(tb, _round_up(pl.cdiv(B, 2), 8)), 8)

    # Keep double-buffered in/out blocks (+ S^T counted twice in case the
    # single-buffer request below is not honored) under a cross-chip-safe
    # 64 MiB budget (v7x VMEM is 64 MiB per TensorCore).
    budget = 64 * 1024 * 1024

    def _vmem_needed(t):
        return 4 * t * row_bytes + 2 * st_bytes + (1 << 20)

    while tb > 8 and _vmem_needed(tb) > budget:
        tb = max(8, _round_up(tb // 2, 8))
    vmem_limit = int(min(max(_vmem_needed(tb) + (1 << 20), 32 * 1024 * 1024),
                         budget))

    # No padding / output slicing: partial last batch block is masked by
    # Pallas (garbage rows only affect their own never-stored output rows).
    grid = (pl.cdiv(B, tb),)

    kernel = functools.partial(
        _ap_physics_kernel, dim_d=D, par=float(par), k=float(k), e=float(e))

    cost = pl.CostEstimate(
        flops=2 * B * D * D + 8 * B * D,
        transcendentals=0,
        bytes_accessed=2 * (B * 2 * D * 4) + st_bytes,
    )

    def _call(st_spec):
        return pl.pallas_call(
            kernel,
            out_shape=jax.ShapeDtypeStruct((B, 2 * D), jnp.float32),
            grid=grid,
            in_specs=[
                pl.BlockSpec((tb, 2 * D), lambda i: (i, 0)),  # y: batch-tiled
                st_spec,                                      # S^T: resident
            ],
            out_specs=pl.BlockSpec((tb, 2 * D), lambda i: (i, 0)),
            compiler_params=pltpu.CompilerParams(
                # Independent batch tiles: shard across TensorCores on v7x.
                dimension_semantics=("parallel",),
                vmem_limit_bytes=vmem_limit,
            ),
            cost_estimate=cost,
            interpret=interpret,
        )(y, st)

    try:
        # S^T never changes across the grid (constant index_map): request a
        # single VMEM buffer instead of the default 2-deep pipeline, saving
        # D*D*4 bytes of VMEM (matters on v7x at large D).
        out = _call(pl.BlockSpec((D, D), lambda i: (0, 0),
                                 pipeline_mode=pl.Buffered(1)))
    except Exception:
        # Fallback for jax versions where pipeline_mode is not honored on the
        # main pallas_call pipeline: default double-buffering (one extra S^T
        # copy in VMEM; DMA'd only once either way).
        out = _call(pl.BlockSpec((D, D), lambda i: (0, 0)))
    return out


def reference_forward(y, S, par, k=8.0, e=0.01):
    """Direct jnp transcription of the PyTorch forward (for checking)."""
    D = y.shape[1] // 2
    u = y[:, :D].T
    v = y[:, D:].T
    mk = S @ u
    pde1 = mk + k * u * (1.0 - u) * (u - par)
    pde2 = -e * (k * u * (u - par - 1.0) + v)
    return jnp.concatenate([pde1, pde2], axis=0).T


if __name__ == "__main__":
    key = jax.random.PRNGKey(0)
    ky, ks = jax.random.split(key)

    B, D = 16, 128          # small test: tb=8 -> 2 grid steps
    par = 0.15              # Aliev-Panfilov 'a' parameter

    # Test data made of small multiples of 1/4 and 1/8 so the MXU matmul is
    # exact and matches the jnp reference regardless of matmul precision mode.
    y = jax.random.randint(ky, (B, 2 * D), -4, 5).astype(jnp.float32) / 4.0
    S = jax.random.randint(ks, (D, D), -4, 5).astype(jnp.float32) / 8.0

    out = ap_model_physics_forward(y, S, par)
    out = jax.block_until_ready(out)

    ref = reference_forward(y, S, par)
    assert out.shape == (B, 2 * D), out.shape
    max_err = float(jnp.max(jnp.abs(out - ref)))
    assert jnp.allclose(out, ref, atol=1e-5, rtol=1e-5), max_err

    print("KERNEL_OK")
</pallas_src>

<mosaic_0001>
module attributes {stable_mosaic.version = 11 : i64} {
  func.func @_ap_physics_kernel(%arg0: i32, %arg1: memref<8x256xf32, #tpu.memory_space<vmem>>, %arg2: memref<128x128xf32, #tpu.memory_space<vmem>>, %arg3: memref<8x256xf32, #tpu.memory_space<vmem>>) attributes {dimension_semantics = [#tpu.dimension_semantics<parallel>], iteration_bounds = array<i64: 2>, scalar_prefetch = 0 : i64, scratch_operands = 0 : i64, tpu.core_type = #tpu.core_type<tc>, window_params = [{transform_indices = @transform_0, window_bounds = array<i64: 8, 256>}, {pipeline_mode = #tpu.pipeline_mode<synchronous>, transform_indices = @transform_1, window_bounds = array<i64: 128, 128>}, {transform_indices = @transform_2, window_bounds = array<i64: 8, 256>}]} {
    %c0 = arith.constant 0 : index
    %c0_0 = arith.constant 0 : index
    %0 = vector.load %arg1[%c0, %c0_0] : memref<8x256xf32, #tpu.memory_space<vmem>>, vector<8x128xf32>
    %c0_1 = arith.constant 0 : index
    %c128 = arith.constant 128 : index
    %1 = vector.load %arg1[%c0_1, %c128] : memref<8x256xf32, #tpu.memory_space<vmem>>, vector<8x128xf32>
    %c0_2 = arith.constant 0 : index
    %c0_3 = arith.constant 0 : index
    %2 = vector.load %arg2[%c0_2, %c0_3] : memref<128x128xf32, #tpu.memory_space<vmem>>, vector<128x128xf32>
    %cst = arith.constant dense<0.000000e+00> : vector<8x128xf32>
    %3 = tpu.matmul %0, %2, %cst {dimension_numbers = #tpu.dot_dimension_numbers<[1], [0], [0], [1], [0, 0, 1, 1], [], []>, precision = #tpu.contract_precision<fp32>} : vector<8x128xf32>, vector<128x128xf32>, vector<8x128xf32> -> vector<8x128xf32>
    %cst_4 = arith.constant 8.000000e+00 : f32
    %4 = vector.broadcast %cst_4 : f32 to vector<8x128xf32>
    %5 = arith.mulf %4, %0 : vector<8x128xf32>
    %cst_5 = arith.constant 1.500000e-01 : f32
    %6 = vector.broadcast %cst_5 : f32 to vector<8x128xf32>
    %7 = arith.subf %0, %6 : vector<8x128xf32>
    %cst_6 = arith.constant 1.000000e+00 : f32
    %8 = vector.broadcast %cst_6 : f32 to vector<8x128xf32>
    %9 = arith.subf %8, %0 : vector<8x128xf32>
    %10 = arith.mulf %5, %9 : vector<8x128xf32>
    %11 = arith.mulf %10, %7 : vector<8x128xf32>
    %12 = arith.addf %3, %11 : vector<8x128xf32>
    %cst_7 = arith.constant 1.000000e+00 : f32
    %13 = vector.broadcast %cst_7 : f32 to vector<8x128xf32>
    %14 = arith.subf %7, %13 : vector<8x128xf32>
    %15 = arith.mulf %5, %14 : vector<8x128xf32>
    %16 = arith.addf %15, %1 : vector<8x128xf32>
    %cst_8 = arith.constant -0.00999999977 : f32
    %17 = vector.broadcast %cst_8 : f32 to vector<8x128xf32>
    %18 = arith.mulf %17, %16 : vector<8x128xf32>
    %c0_9 = arith.constant 0 : index
    %c0_10 = arith.constant 0 : index
    %19 = vector.load %arg3[%c0_9, %c0_10] : memref<8x256xf32, #tpu.memory_space<vmem>>, vector<8x128xf32>
    tpu.vector_store %arg3[%c0_9, %c0_10], %12 {strides = array<i32>} : memref<8x256xf32, #tpu.memory_space<vmem>>, vector<8x128xf32>,
    %c0_11 = arith.constant 0 : index
    %c128_12 = arith.constant 128 : index
    %20 = vector.load %arg3[%c0_11, %c128_12] : memref<8x256xf32, #tpu.memory_space<vmem>>, vector<8x128xf32>
    tpu.vector_store %arg3[%c0_11, %c128_12], %18 {strides = array<i32>} : memref<8x256xf32, #tpu.memory_space<vmem>>, vector<8x128xf32>,
    return
  }
  func.func @transform_0(%arg0: i32) -> (i32, i32) {
    %c0_i32 = arith.constant 0 : i32
    %c0_i32_0 = arith.constant 0 : i32
    return %arg0, %c0_i32 : i32, i32
  }
  func.func @transform_1(%arg0: i32) -> (i32, i32) {
    %c0_i32 = arith.constant 0 : i32
    %c0_i32_0 = arith.constant 0 : i32
    %c0_i32_1 = arith.constant 0 : i32
    return %c0_i32, %c0_i32_0 : i32, i32
  }
  func.func @transform_2(%arg0: i32) -> (i32, i32) {
    %c0_i32 = arith.constant 0 : i32
    %c0_i32_0 = arith.constant 0 : i32
    return %arg0, %c0_i32 : i32, i32
  }
}

module attributes {stable_mosaic.version = 11 : i64} {
  func.func @_ap_physics_kernel(%arg0: i32, %arg1: memref<8x256xf32, #tpu.memory_space<vmem>>, %arg2: memref<128x128xf32, #tpu.memory_space<vmem>>, %arg3: memref<8x256xf32, #tpu.memory_space<vmem>>) attributes {dimension_semantics = [#tpu.dimension_semantics<parallel>], iteration_bounds = array<i64: 2>, scalar_prefetch = 0 : i64, scratch_operands = 0 : i64, tpu.core_type = #tpu.core_type<tc>, window_params = [{transform_indices = @transform_0, window_bounds = array<i64: 8, 256>}, {pipeline_mode = #tpu.pipeline_mode<synchronous>, transform_indices = @transform_1, window_bounds = array<i64: 128, 128>}, {transform_indices = @transform_2, window_bounds = array<i64: 8, 256>}]} {
    %c0 = arith.constant 0 : index
    %c0_0 = arith.constant 0 : index
    %0 = vector.load %arg1[%c0, %c0_0] : memref<8x256xf32, #tpu.memory_space<vmem>>, vector<8x128xf32>
    %c0_1 = arith.constant 0 : index
    %c128 = arith.constant 128 : index
    %1 = vector.load %arg1[%c0_1, %c128] : memref<8x256xf32, #tpu.memory_space<vmem>>, vector<8x128xf32>
    %c0_2 = arith.constant 0 : index
    %c0_3 = arith.constant 0 : index
    %2 = vector.load %arg2[%c0_2, %c0_3] : memref<128x128xf32, #tpu.memory_space<vmem>>, vector<128x128xf32>
    %cst = arith.constant dense<0.000000e+00> : vector<8x128xf32>
    %3 = tpu.matmul %0, %2, %cst {dimension_numbers = #tpu.dot_dimension_numbers<[1], [0], [0], [1], [0, 0, 1, 1], [], []>, precision = #tpu.contract_precision<fp32>} : vector<8x128xf32>, vector<128x128xf32>, vector<8x128xf32> -> vector<8x128xf32>
    %cst_4 = arith.constant 8.000000e+00 : f32
    %4 = vector.broadcast %cst_4 : f32 to vector<8x128xf32>
    %5 = arith.mulf %4, %0 : vector<8x128xf32>
    %cst_5 = arith.constant 1.500000e-01 : f32
    %6 = vector.broadcast %cst_5 : f32 to vector<8x128xf32>
    %7 = arith.subf %0, %6 : vector<8x128xf32>
    %cst_6 = arith.constant 1.000000e+00 : f32
    %8 = vector.broadcast %cst_6 : f32 to vector<8x128xf32>
    %9 = arith.subf %8, %0 : vector<8x128xf32>
    %10 = arith.mulf %5, %9 : vector<8x128xf32>
    %11 = arith.mulf %10, %7 : vector<8x128xf32>
    %12 = arith.addf %3, %11 : vector<8x128xf32>
    %cst_7 = arith.constant 1.000000e+00 : f32
    %13 = vector.broadcast %cst_7 : f32 to vector<8x128xf32>
    %14 = arith.subf %7, %13 : vector<8x128xf32>
    %15 = arith.mulf %5, %14 : vector<8x128xf32>
    %16 = arith.addf %15, %1 : vector<8x128xf32>
    %cst_8 = arith.constant -0.00999999977 : f32
    %17 = vector.broadcast %cst_8 : f32 to vector<8x128xf32>
    %18 = arith.mulf %17, %16 : vector<8x128xf32>
    %c0_9 = arith.constant 0 : index
    %c0_10 = arith.constant 0 : index
    %19 = vector.load %arg3[%c0_9, %c0_10] : memref<8x256xf32, #tpu.memory_space<vmem>>, vector<8x128xf32>
    tpu.vector_store %arg3[%c0_9, %c0_10], %12 {strides = array<i32>} : memref<8x256xf32, #tpu.memory_space<vmem>>, vector<8x128xf32>,
    %c0_11 = arith.constant 0 : index
    %c128_12 = arith.constant 128 : index
    %20 = vector.load %arg3[%c0_11, %c128_12] : memref<8x256xf32, #tpu.memory_space<vmem>>, vector<8x128xf32>
    tpu.vector_store %arg3[%c0_11, %c128_12], %18 {strides = array<i32>} : memref<8x256xf32, #tpu.memory_space<vmem>>, vector<8x128xf32>,
    return
  }
  func.func @transform_0(%arg0: i32) -> (i32, i32) {
    %c0_i32 = arith.constant 0 : i32
    %c0_i32_0 = arith.constant 0 : i32
    return %arg0, %c0_i32 : i32, i32
  }
  func.func @transform_1(%arg0: i32) -> (i32, i32) {
    %c0_i32 = arith.constant 0 : i32
    %c0_i32_0 = arith.constant 0 : i32
    %c0_i32_1 = arith.constant 0 : i32
    return %c0_i32, %c0_i32_0 : i32, i32
  }
  func.func @transform_2(%arg0: i32) -> (i32, i32) {
    %c0_i32 = arith.constant 0 : i32
    %c0_i32_0 = arith.constant 0 : i32
    return %arg0, %c0_i32 : i32, i32
  }
}

</mosaic_0001>

<llo_original>
// kernel: tpu_custom_call.1
$region0: #{tpu_custom_call.1}
  #allocation0 [shape = 'u32[]', space=smem, size = 0x4, offset = 0x4, fixed_abs, tag = 'smem constant byte address 0x4 - core index']
  #allocation1 [shape = 'u32[144,128]{1,0:T(1,128)}', space=vmem, size = 0x12000, scoped, tag = 'internal scratch']
  %s0 = inlined_call_operand.hbm [shape: f32[16,256], index: 0, kind: input, shape index: {}]
  %s1 = inlined_call_operand.hbm [shape: f32[128,128], index: 1, kind: input, shape index: {}]
  %s2 = inlined_call_operand.hbm [shape: f32[16,256], index: 2, kind: output, shape index: {}]
  %s3 = sld [smem:[#allocation0]]
  $region49: #{tpu_custom_call.1} parent=0
    _
  %s5 = ssub.s32 1, %s3
  %s6 = scalar_select 0, %s5, %s3
  $region1: #{tpu_custom_call.1} parent=0
    #allocation2 [shape = 'u8[16384]{0}', space=vmem, size = 0x4000, scoped, tag = 'input window, operand 0']
    #allocation3 [shape = 's32[2]{0}', space=sflag, size = 0x8, scoped, tag = 'scoped memory for tpu_custom_call.1']
    #allocation4 [shape = 's32[2]{0}', space=sflag, size = 0x8, scoped, tag = 'scoped memory for tpu_custom_call.1']
    #allocation5 [shape = 'u8[65536]{0}', space=vmem, size = 0x10000, scoped, tag = 'input window, operand 1, single buffered']
    #allocation6 [shape = 's32[1]{0}', space=sflag, size = 0x4, scoped, tag = 'scoped memory for tpu_custom_call.1']
    #allocation7 [shape = 'u8[16384]{0}', space=vmem, size = 0x4000, scoped, tag = 'output window, operand 0']
    %7 = vsyncpa [#allocation3], 0
    %s8 = scalar_lea.sflag [#allocation3], 1
    %9 = vsyncpa %s8, 0
    %10 = vsyncpa [#allocation6], 0
    %11 = vsyncpa [#allocation4], 0
    %s12 = scalar_lea.sflag [#allocation4], 1
    %13 = vsyncpa %s12, 0
    loop: start=0, step=1, limit=4
    $region2: #{tpu_custom_call.1} parent=1 // loop_pre_header
      _
    $region3: #{tpu_custom_call.1} parent=1 // loop_header
      %s15 = sphi 0, %s19
      %p16 = scmp.ge.s32.totalorder %s15, 4
      %s25 = sphi 0, %s27
      %s28 = sphi 0, %s25
      %s29 = sphi 0, %s28
      %s45 = sphi 0, %s29
      %s49 = sphi 0, %s49
      %s51 = sphi 0, %s49
      %s52 = sphi 0, %s51
      %s66 = sphi 0, %s52
      %s72 = sphi 0, %s74
      %s75 = sphi 0, %s72
      %s76 = sphi 0, %s75
      %s92 = sphi 0, %s76
    $region4: #{tpu_custom_call.1} parent=1 // loop_header_branch
      %18 = sbr.rel (%p16) target = $region8
    $region5: #{tpu_custom_call.1} parent=1 // loop_body
      %s20 = ssub.s32 %s15, 1
      %s21 = ssub.s32 %s15, 2
      %s22 = sadd.s32 %s15, 1
      %s23 = ssub.s32 %s15, %s22
      %p24 = scmp.eq.s32.totalorder %s23, 0
      %s26 = sadd.s32 %s25, 1
      %s27 = scalar_select %p24, %s25, %s26
      %p30 = pneg %p24
      %p31 = scmp.eq.s32.totalorder %s15, 1
      %p32 = por %p30, %p31
      %p33 = scmp.ne.s32.totalorder %s25, %s28
      %p34 = scmp.eq.s32.totalorder %s15, 0
      %p35 = por %p33, %p34
      %p36 = scmp.ne.s32.totalorder %s25, %s28
      %p37 = scmp.eq.s32.totalorder %s20, 1
      %p38 = por %p36, %p37
      %p39 = scmp.ne.s32.totalorder %s28, %s29
      %p40 = scmp.eq.s32.totalorder %s20, 0
      %p41 = por %p39, %p40
      %p42 = scmp.ne.s32.totalorder %s28, %s29
      %p43 = scmp.eq.s32.totalorder %s21, 1
      %p44 = por %p42, %p43
      %p46 = scmp.ne.s32.totalorder %s29, %s45
      %p47 = scmp.eq.s32.totalorder %s21, 0
      %p48 = por %p46, %p47
      %s50 = sadd.s32 %s49, 1
      %p53 = scmp.eq.s32.totalorder %s15, 1
      %p54 = scmp.ne.s32.totalorder %s49, %s51
      %p55 = scmp.eq.s32.totalorder %s15, 0
      %p56 = por %p54, %p55
      %p57 = scmp.ne.s32.totalorder %s49, %s51
      %p58 = scmp.eq.s32.totalorder %s20, 1
      %p59 = por %p57, %p58
      %p60 = scmp.ne.s32.totalorder %s51, %s52
      %p61 = scmp.eq.s32.totalorder %s20, 0
      %p62 = por %p60, %p61
      %p63 = scmp.ne.s32.totalorder %s51, %s52
      %p64 = scmp.eq.s32.totalorder %s21, 1
      %p65 = por %p63, %p64
      %p67 = scmp.ne.s32.totalorder %s52, %s66
      %p68 = scmp.eq.s32.totalorder %s21, 0
      %p69 = por %p67, %p68
      %s70 = ssub.s32 %s15, %s22
      %p71 = scmp.eq.s32.totalorder %s70, 0
      %s73 = sadd.s32 %s72, 1
      %s74 = scalar_select %p71, %s72, %s73
      %p77 = pneg %p71
      %p78 = scmp.eq.s32.totalorder %s15, 1
      %p79 = por %p77, %p78
      %p80 = scmp.ne.s32.totalorder %s72, %s75
      %p81 = scmp.eq.s32.totalorder %s15, 0
      %p82 = por %p80, %p81
      %p83 = scmp.ne.s32.totalorder %s72, %s75
      %p84 = scmp.eq.s32.totalorder %s20, 1
      %p85 = por %p83, %p84
      %p86 = scmp.ne.s32.totalorder %s75, %s76
      %p87 = scmp.eq.s32.totalorder %s20, 0
      %p88 = por %p86, %p87
      %p89 = scmp.ne.s32.totalorder %s75, %s76
      %p90 = scmp.eq.s32.totalorder %s21, 1
      %p91 = por %p89, %p90
      %p93 = scmp.ne.s32.totalorder %s76, %s92
      %p94 = scmp.eq.s32.totalorder %s21, 0
      %p95 = por %p93, %p94
      %p96 = scmp.le.s32.totalorder 1, %s15
      %p97 = scmp.lt.s32.totalorder %s15, 3
      %p98 = pnand %p96, %p97
      %p99 = pneg %p98
      // Predicated region
      $region9: #{tpu_custom_call.1} parent=5 // pred_check
        _
      $region10: #{tpu_custom_call.1} parent=5 // pred_check_branch
        %101 = sbr.rel (%p98) target = $region12
      $region11: #{tpu_custom_call.1} parent=5 // pred_region
        %s102 = ssub.s32 %s15, 1
        // Predicated region
        $region13: #{tpu_custom_call.1} parent=11 // pred_check
          %p103 = pneg %p62
        $region14: #{tpu_custom_call.1} parent=11 // pred_check_branch
          %105 = sbr.rel (%p103) target = $region16
        $region15: #{tpu_custom_call.1} parent=11 // pred_region
          %s107 = ssub.s32 2048, 2048
          %108 = vsyncadd [#allocation6], %s107
          %s109 = sshll.u32 [#allocation5], 4
          %s110 = int_to_ptr.vmem [resolvable:$true] %s109
          %115 = dma.hbm_to_vmem [thread:$0]  %s1, 2048, %s110, [#allocation6], 128, 128, 8
        $region16: #{tpu_custom_call.1} parent=11 // pred_fallthru
          _
      $region12: #{tpu_custom_call.1} parent=5 // pred_fallthru
        _
      %p116 = scmp.lt.s32.totalorder %s15, 2
      // Predicated region
      $region17: #{tpu_custom_call.1} parent=5 // pred_check
        %p117 = pneg %p116
      $region18: #{tpu_custom_call.1} parent=5 // pred_check_branch
        %119 = sbr.rel (%p117) target = $region20
      $region19: #{tpu_custom_call.1} parent=5 // pred_region
        // Predicated region
        $region21: #{tpu_custom_call.1} parent=19 // pred_check
          %p120 = pneg %p35
        $region22: #{tpu_custom_call.1} parent=19 // pred_check_branch
          %122 = sbr.rel (%p120) target = $region24
        $region23: #{tpu_custom_call.1} parent=19 // pred_region
          %s123 = sand.u32 %s25, 1
          %s124 = scalar_lea.sflag [#allocation3], %s123
          %s125 = sand.u32 %s25, 1
          %s126 = smul.addr %s125, 16
          %s127 = scalar_lea.vmem [#allocation2], %s126
          %s129 = ssub.s32 256, 256
          %130 = vsyncadd %s124, %s129
          %s131 = smul.addr %s15, 2
          %s132 = smul.addr %s131, 128
          %s133 = scalar_lea.hbm %s0, %s132
          %s135 = sshll.u32 %s127, 4
          %s136 = int_to_ptr.vmem [resolvable:$true] %s135
          %138 = dma.hbm_to_vmem [thread:$0]  %s133, 256, %s136, %s124
        $region24: #{tpu_custom_call.1} parent=19 // pred_fallthru
          _
      $region20: #{tpu_custom_call.1} parent=5 // pred_fallthru
        _
      %p139 = scmp.le.s32.totalorder 1, %s15
      %p140 = scmp.lt.s32.totalorder %s15, 3
      %p141 = pnand %p139, %p140
      %p142 = pneg %p141
      // Predicated region
      $region25: #{tpu_custom_call.1} parent=5 // pred_check
        _
      $region26: #{tpu_custom_call.1} parent=5 // pred_check_branch
        %144 = sbr.rel (%p141) target = $region28
      $region27: #{tpu_custom_call.1} parent=5 // pred_region
        %s145 = ssub.s32 %s15, 1
        %s146 = sand.u32 %s28, 1
        %s147 = scalar_lea.sflag [#allocation3], %s146
        %s148 = sand.u32 %s28, 1
        %s149 = smul.addr %s148, 16
        %s150 = scalar_lea.vmem [#allocation2], %s149
        // Predicated region
        $region29: #{tpu_custom_call.1} parent=27 // pred_check
          %p151 = pneg %p41
        $region30: #{tpu_custom_call.1} parent=27 // pred_check_branch
          %153 = sbr.rel (%p151) target = $region32
        $region31: #{tpu_custom_call.1} parent=27 // pred_region
          %154 = dma.done %s147, 256
        $region32: #{tpu_custom_call.1} parent=27 // pred_fallthru
          _
        // Predicated region
        $region33: #{tpu_custom_call.1} parent=27 // pred_check
          %p155 = pneg %p62
        $region34: #{tpu_custom_call.1} parent=27 // pred_check_branch
          %157 = sbr.rel (%p155) target = $region36
        $region35: #{tpu_custom_call.1} parent=27 // pred_region
          %158 = dma.done [#allocation6], 2048
        $region36: #{tpu_custom_call.1} parent=27 // pred_fallthru
          _
        %s159 = sand.u32 %s28, 1
        %s160 = scalar_lea.sflag [#allocation3], %s159
        %s161 = sand.u32 %s28, 1
        %s162 = smul.addr %s161, 16
        %s163 = scalar_lea.vmem [#allocation2], %s162
        %p164 = pneg %p41
        %p165 = pneg %p38
        %p166 = pneg %p62
        %p167 = pneg %p59
        %p168 = pneg %p88
        %p169 = pneg %p85
        %s170 = sand.u32 %s75, 1
        %s171 = scalar_lea.sflag [#allocation4], %s170
        %s172 = sand.u32 %s75, 1
        %s173 = smul.addr %s172, 16
        %s174 = scalar_lea.vmem [#allocation7], %s173
        %v175 = vld [vmem:[%s150] sm:$0xff]
        %v176 = vld [vmem:[%s150 + $0x8] sm:$0xff]
        %v177 = vld [vmem:[#allocation5] sm:$0xff]
        %v178 = vld [vmem:[#allocation5 + $0x8] sm:$0xff]
        %v179 = vld [vmem:[#allocation5 + $0x10] sm:$0xff]
        %v180 = vld [vmem:[#allocation5 + $0x18] sm:$0xff]
        %v181 = vld [vmem:[#allocation5 + $0x20] sm:$0xff]
        %v182 = vld [vmem:[#allocation5 + $0x28] sm:$0xff]
        %v183 = vld [vmem:[#allocation5 + $0x30] sm:$0xff]
        %v184 = vld [vmem:[#allocation5 + $0x38] sm:$0xff]
        %v185 = vld [vmem:[#allocation5 + $0x40] sm:$0xff]
        %v186 = vld [vmem:[#allocation5 + $0x48] sm:$0xff]
        %v187 = vld [vmem:[#allocation5 + $0x50] sm:$0xff]
        %v188 = vld [vmem:[#allocation5 + $0x58] sm:$0xff]
        %v189 = vld [vmem:[#allocation5 + $0x60] sm:$0xff]
        %v190 = vld [vmem:[#allocation5 + $0x68] sm:$0xff]
        %v191 = vld [vmem:[#allocation5 + $0x70] sm:$0xff]
        %v192 = vld [vmem:[#allocation5 + $0x78] sm:$0xff]
        %v193 = vmul.f32 %v175, 8.0
        %v194 = vsub.f32 %v175, 0.15
        %v195 = vsub.f32 1.0, %v175
        %v196 = vmul.f32 %v193, %v195
        %v197 = vmul.f32 %v196, %v194
        %198 = vmatprep.subr.mxu0 0.0
        %v199 = vand.u32 %v177, 4294901760
        %200 = vmatpush1.msra.mxu0 %v199
        %201 = vmatprep.subr.mxu0 0.0
        %v202 = vand.u32 %v178, 4294901760
        %203 = vmatpush1.msra.mxu0 %v202
        %204 = vmatprep.subr.mxu0 0.0
        %v205 = vand.u32 %v179, 4294901760
        %206 = vmatpush1.msra.mxu0 %v205
        %207 = vmatprep.subr.mxu0 0.0
        %v208 = vand.u32 %v180, 4294901760
        %209 = vmatpush1.msra.mxu0 %v208
        %210 = vmatprep.subr.mxu0 0.0
        %v211 = vand.u32 %v181, 4294901760
        %212 = vmatpush1.msra.mxu0 %v211
        %213 = vmatprep.subr.mxu0 0.0
        %v214 = vand.u32 %v182, 4294901760
        %215 = vmatpush1.msra.mxu0 %v214
        %216 = vmatprep.subr.mxu0 0.0
        %v217 = vand.u32 %v183, 4294901760
        %218 = vmatpush1.msra.mxu0 %v217
        %219 = vmatprep.subr.mxu0 0.0
        %v220 = vand.u32 %v184, 4294901760
        %221 = vmatpush1.msra.mxu0 %v220
        %222 = vmatprep.subr.mxu0 0.0
        %v223 = vand.u32 %v185, 4294901760
        %224 = vmatpush1.msra.mxu0 %v223
        %225 = vmatprep.subr.mxu0 0.0
        %v226 = vand.u32 %v186, 4294901760
        %227 = vmatpush1.msra.mxu0 %v226
        %228 = vmatprep.subr.mxu0 0.0
        %v229 = vand.u32 %v187, 4294901760
        %230 = vmatpush1.msra.mxu0 %v229
        %231 = vmatprep.subr.mxu0 0.0
        %v232 = vand.u32 %v188, 4294901760
        %233 = vmatpush1.msra.mxu0 %v232
        %234 = vmatprep.subr.mxu0 0.0
        %v235 = vand.u32 %v189, 4294901760
        %236 = vmatpush1.msra.mxu0 %v235
        %237 = vmatprep.subr.mxu0 0.0
        %v238 = vand.u32 %v190, 4294901760
        %239 = vmatpush1.msra.mxu0 %v238
        %240 = vmatprep.subr.mxu0 0.0
        %v241 = vand.u32 %v191, 4294901760
        %242 = vmatpush1.msra.mxu0 %v241
        %243 = vmatprep.subr.mxu0 0.0
        %v244 = vand.u32 %v192, 4294901760
        %245 = vmatpush1.msra.mxu0 %v244
        %246 = vmatprep.subr.mxu0 0.0
        %247 = vmatpush1.msra.mxu0 0.0
        %248 = vmatprep.subr.mxu0 0.0
        %249 = vmatpush1.msra.mxu0 0.0
        %250 = vmatprep.subr.mxu0 0.0
        %251 = vmatpush1.msra.mxu0 0.0
        %252 = vmatprep.subr.mxu0 0.0
        %253 = vmatpush1.msra.mxu0 0.0
        %254 = vmatprep.subr.mxu0 0.0
        %255 = vmatpush1.msra.mxu0 0.0
        %256 = vmatprep.subr.mxu0 0.0
        %257 = vmatpush1.msra.mxu0 0.0
        %258 = vmatprep.subr.mxu0 0.0
        %259 = vmatpush1.msra.mxu0 0.0
        %260 = vmatprep.subr.mxu0 0.0
        %261 = vmatpush1.msra.mxu0 0.0
        %262 = vmatprep.subr.mxu0 0.0
        %263 = vmatpush1.msra.mxu0 0.0
        %264 = vmatprep.subr.mxu0 0.0
        %265 = vmatpush1.msra.mxu0 0.0
        %266 = vmatprep.subr.mxu0 0.0
        %267 = vmatpush1.msra.mxu0 0.0
        %268 = vmatprep.subr.mxu0 0.0
        %269 = vmatpush1.msra.mxu0 0.0
        %270 = vmatprep.subr.mxu0 0.0
        %271 = vmatpush1.msra.mxu0 0.0
        %272 = vmatprep.subr.mxu0 0.0
        %273 = vmatpush1.msra.mxu0 0.0
        %274 = vmatprep.subr.mxu0 0.0
        %275 = vmatpush1.msra.mxu0 0.0
        %276 = vmatprep.subr.mxu0 0.0
        %277 = vmatpush1.msra.mxu0 0.0
        %278 = vmatprep.mubr.f32.mxu0 0.0
        %v279 = vand.u32 %v175, 4294901760
        %v280 = vsub.f32 %v175, %v279
        %v281 = vand.u32 %v280, 4294901760
        %v282 = vsub.f32 %v280, %v281
        %v283 = vand.u32 %v282, 4294901760
        %284 = vmatmul.mubr.f32.gmra.mrb[0].mxu0 %v283
        %v285 = vpop.f32.mrb[0].mxu0
        %v286 = vadd.f32 %v197, %v285
        %v287 = vpop.f32.mrb[0].mxu0
        %288 = vdwg.mxu0
        %289 = vmatprep.subr.mxu0 0.0
        %v290 = vand.u32 %v177, 4294901760
        %v291 = vsub.f32 %v177, %v290
        %v292 = vand.u32 %v291, 4294901760
        %v293 = vsub.f32 %v291, %v292
        %v294 = vand.u32 %v293, 4294901760
        %295 = vmatpush1.msra.mxu0 %v294
        %296 = vmatprep.subr.mxu0 0.0
        %v297 = vand.u32 %v178, 4294901760
        %v298 = vsub.f32 %v178, %v297
        %v299 = vand.u32 %v298, 4294901760
        %v300 = vsub.f32 %v298, %v299
        %v301 = vand.u32 %v300, 4294901760
        %302 = vmatpush1.msra.mxu0 %v301
        %303 = vmatprep.subr.mxu0 0.0
        %v304 = vand.u32 %v179, 4294901760
        %v305 = vsub.f32 %v179, %v304
        %v306 = vand.u32 %v305, 4294901760
        %v307 = vsub.f32 %v305, %v306
        %v308 = vand.u32 %v307, 4294901760
        %309 = vmatpush1.msra.mxu0 %v308
        %310 = vmatprep.subr.mxu0 0.0
        %v311 = vand.u32 %v180, 4294901760
        %v312 = vsub.f32 %v180, %v311
        %v313 = vand.u32 %v312, 4294901760
        %v314 = vsub.f32 %v312, %v313
        %v315 = vand.u32 %v314, 4294901760
        %316 = vmatpush1.msra.mxu0 %v315
        %317 = vmatprep.subr.mxu0 0.0
        %v318 = vand.u32 %v181, 4294901760
        %v319 = vsub.f32 %v181, %v318
        %v320 = vand.u32 %v319, 4294901760
        %v321 = vsub.f32 %v319, %v320
        %v322 = vand.u32 %v321, 4294901760
        %323 = vmatpush1.msra.mxu0 %v322
        %324 = vmatprep.subr.mxu0 0.0
        %v325 = vand.u32 %v182, 4294901760
        %v326 = vsub.f32 %v182, %v325
        %v327 = vand.u32 %v326, 4294901760
        %v328 = vsub.f32 %v326, %v327
        %v329 = vand.u32 %v328, 4294901760
        %330 = vmatpush1.msra.mxu0 %v329
        %331 = vmatprep.subr.mxu0 0.0
        %v332 = vand.u32 %v183, 4294901760
        %v333 = vsub.f32 %v183, %v332
        %v334 = vand.u32 %v333, 4294901760
        %v335 = vsub.f32 %v333, %v334
        %v336 = vand.u32 %v335, 4294901760
        %337 = vmatpush1.msra.mxu0 %v336
        %338 = vmatprep.subr.mxu0 0.0
        %v339 = vand.u32 %v184, 4294901760
        %v340 = vsub.f32 %v184, %v339
        %v341 = vand.u32 %v340, 4294901760
        %v342 = vsub.f32 %v340, %v341
        %v343 = vand.u32 %v342, 4294901760
        %344 = vmatpush1.msra.mxu0 %v343
        %345 = vmatprep.subr.mxu0 0.0
        %v346 = vand.u32 %v185, 4294901760
        %v347 = vsub.f32 %v185, %v346
        %v348 = vand.u32 %v347, 4294901760
        %v349 = vsub.f32 %v347, %v348
        %v350 = vand.u32 %v349, 4294901760
        %351 = vmatpush1.msra.mxu0 %v350
        %352 = vmatprep.subr.mxu0 0.0
        %v353 = vand.u32 %v186, 4294901760
        %v354 = vsub.f32 %v186, %v353
        %v355 = vand.u32 %v354, 4294901760
        %v356 = vsub.f32 %v354, %v355
        %v357 = vand.u32 %v356, 4294901760
        %358 = vmatpush1.msra.mxu0 %v357
        %359 = vmatprep.subr.mxu0 0.0
        %v360 = vand.u32 %v187, 4294901760
        %v361 = vsub.f32 %v187, %v360
        %v362 = vand.u32 %v361, 4294901760
        %v363 = vsub.f32 %v361, %v362
        %v364 = vand.u32 %v363, 4294901760
        %365 = vmatpush1.msra.mxu0 %v364
        %366 = vmatprep.subr.mxu0 0.0
        %v367 = vand.u32 %v188, 4294901760
        %v368 = vsub.f32 %v188, %v367
        %v369 = vand.u32 %v368, 4294901760
        %v370 = vsub.f32 %v368, %v369
        %v371 = vand.u32 %v370, 4294901760
        %372 = vmatpush1.msra.mxu0 %v371
        %373 = vmatprep.subr.mxu0 0.0
        %v374 = vand.u32 %v189, 4294901760
        %v375 = vsub.f32 %v189, %v374
        %v376 = vand.u32 %v375, 4294901760
        %v377 = vsub.f32 %v375, %v376
        %v378 = vand.u32 %v377, 4294901760
        %379 = vmatpush1.msra.mxu0 %v378
        %380 = vmatprep.subr.mxu0 0.0
        %v381 = vand.u32 %v190, 4294901760
        %v382 = vsub.f32 %v190, %v381
        %v383 = vand.u32 %v382, 4294901760
        %v384 = vsub.f32 %v382, %v383
        %v385 = vand.u32 %v384, 4294901760
        %386 = vmatpush1.msra.mxu0 %v385
        %387 = vmatprep.subr.mxu0 0.0
        %v388 = vand.u32 %v191, 4294901760
        %v389 = vsub.f32 %v191, %v388
        %v390 = vand.u32 %v389, 4294901760
        %v391 = vsub.f32 %v389, %v390
        %v392 = vand.u32 %v391, 4294901760
        %393 = vmatpush1.msra.mxu0 %v392
        %394 = vmatprep.subr.mxu0 0.0
        %v395 = vand.u32 %v192, 4294901760
        %v396 = vsub.f32 %v192, %v395
        %v397 = vand.u32 %v396, 4294901760
        %v398 = vsub.f32 %v396, %v397
        %v399 = vand.u32 %v398, 4294901760
        %400 = vmatpush1.msra.mxu0 %v399
        %401 = vmatprep.subr.mxu0 0.0
        %402 = vmatpush1.msra.mxu0 0.0
        %403 = vmatprep.subr.mxu0 0.0
        %404 = vmatpush1.msra.mxu0 0.0
        %405 = vmatprep.subr.mxu0 0.0
        %406 = vmatpush1.msra.mxu0 0.0
        %407 = vmatprep.subr.mxu0 0.0
        %408 = vmatpush1.msra.mxu0 0.0
        %409 = vmatprep.subr.mxu0 0.0
        %410 = vmatpush1.msra.mxu0 0.0
        %411 = vmatprep.subr.mxu0 0.0
        %412 = vmatpush1.msra.mxu0 0.0
        %413 = vmatprep.subr.mxu0 0.0
        %414 = vmatpush1.msra.mxu0 0.0
        %415 = vmatprep.subr.mxu0 0.0
        %416 = vmatpush1.msra.mxu0 0.0
        %417 = vmatprep.subr.mxu0 0.0
        %418 = vmatpush1.msra.mxu0 0.0
        %419 = vmatprep.subr.mxu0 0.0
        %420 = vmatpush1.msra.mxu0 0.0
        %421 = vmatprep.subr.mxu0 0.0
        %422 = vmatpush1.msra.mxu0 0.0
        %423 = vmatprep.subr.mxu0 0.0
        %424 = vmatpush1.msra.mxu0 0.0
        %425 = vmatprep.subr.mxu0 0.0
        %426 = vmatpush1.msra.mxu0 0.0
        %427 = vmatprep.subr.mxu0 0.0
        %428 = vmatpush1.msra.mxu0 0.0
        %429 = vmatprep.subr.mxu0 0.0
        %430 = vmatpush1.msra.mxu0 0.0
        %431 = vmatprep.subr.mxu0 0.0
        %432 = vmatpush1.msra.mxu0 0.0
        %433 = vmatprep.mubr.f32.mxu0 0.0
        %v434 = vand.u32 %v175, 4294901760
        %435 = vmatmul.mubr.f32.gmra.mrb[0].mxu0 %v434
        %v436 = vpop.f32.mrb[0].mxu0
        %v437 = vadd.f32 %v286, %v436
        %v438 = vpop.f32.mrb[0].mxu0
        %439 = vdwg.mxu0
        %440 = vmatprep.subr.mxu0 0.0
        %v441 = vand.u32 %v177, 4294901760
        %v442 = vsub.f32 %v177, %v441
        %443 = vmatpush1.msra.mxu0 %v442
        %444 = vmatprep.subr.mxu0 0.0
        %v445 = vand.u32 %v178, 4294901760
        %v446 = vsub.f32 %v178, %v445
        %447 = vmatpush1.msra.mxu0 %v446
        %448 = vmatprep.subr.mxu0 0.0
        %v449 = vand.u32 %v179, 4294901760
        %v450 = vsub.f32 %v179, %v449
        %451 = vmatpush1.msra.mxu0 %v450
        %452 = vmatprep.subr.mxu0 0.0
        %v453 = vand.u32 %v180, 4294901760
        %v454 = vsub.f32 %v180, %v453
        %455 = vmatpush1.msra.mxu0 %v454
        %456 = vmatprep.subr.mxu0 0.0
        %v457 = vand.u32 %v181, 4294901760
        %v458 = vsub.f32 %v181, %v457
        %459 = vmatpush1.msra.mxu0 %v458
        %460 = vmatprep.subr.mxu0 0.0
        %v461 = vand.u32 %v182, 4294901760
        %v462 = vsub.f32 %v182, %v461
        %463 = vmatpush1.msra.mxu0 %v462
        %464 = vmatprep.subr.mxu0 0.0
        %v465 = vand.u32 %v183, 4294901760
        %v466 = vsub.f32 %v183, %v465
        %467 = vmatpush1.msra.mxu0 %v466
        %468 = vmatprep.subr.mxu0 0.0
        %v469 = vand.u32 %v184, 4294901760
        %v470 = vsub.f32 %v184, %v469
        %471 = vmatpush1.msra.mxu0 %v470
        %472 = vmatprep.subr.mxu0 0.0
        %v473 = vand.u32 %v185, 4294901760
        %v474 = vsub.f32 %v185, %v473
        %475 = vmatpush1.msra.mxu0 %v474
        %476 = vmatprep.subr.mxu0 0.0
        %v477 = vand.u32 %v186, 4294901760
        %v478 = vsub.f32 %v186, %v477
        %479 = vmatpush1.msra.mxu0 %v478
        %480 = vmatprep.subr.mxu0 0.0
        %v481 = vand.u32 %v187, 4294901760
        %v482 = vsub.f32 %v187, %v481
        %483 = vmatpush1.msra.mxu0 %v482
        %484 = vmatprep.subr.mxu0 0.0
        %v485 = vand.u32 %v188, 4294901760
        %v486 = vsub.f32 %v188, %v485
        %487 = vmatpush1.msra.mxu0 %v486
        %488 = vmatprep.subr.mxu0 0.0
        %v489 = vand.u32 %v189, 4294901760
        %v490 = vsub.f32 %v189, %v489
        %491 = vmatpush1.msra.mxu0 %v490
        %492 = vmatprep.subr.mxu0 0.0
        %v493 = vand.u32 %v190, 4294901760
        %v494 = vsub.f32 %v190, %v493
        %495 = vmatpush1.msra.mxu0 %v494
        %496 = vmatprep.subr.mxu0 0.0
        %v497 = vand.u32 %v191, 4294901760
        %v498 = vsub.f32 %v191, %v497
        %499 = vmatpush1.msra.mxu0 %v498
        %500 = vmatprep.subr.mxu0 0.0
        %v501 = vand.u32 %v192, 4294901760
        %v502 = vsub.f32 %v192, %v501
        %503 = vmatpush1.msra.mxu0 %v502
        %504 = vmatprep.subr.mxu0 0.0
        %505 = vmatpush1.msra.mxu0 0.0
        %506 = vmatprep.subr.mxu0 0.0
        %507 = vmatpush1.msra.mxu0 0.0
        %508 = vmatprep.subr.mxu0 0.0
        %509 = vmatpush1.msra.mxu0 0.0
        %510 = vmatprep.subr.mxu0 0.0
        %511 = vmatpush1.msra.mxu0 0.0
        %512 = vmatprep.subr.mxu0 0.0
        %513 = vmatpush1.msra.mxu0 0.0
        %514 = vmatprep.subr.mxu0 0.0
        %515 = vmatpush1.msra.mxu0 0.0
        %516 = vmatprep.subr.mxu0 0.0
        %517 = vmatpush1.msra.mxu0 0.0
        %518 = vmatprep.subr.mxu0 0.0
        %519 = vmatpush1.msra.mxu0 0.0
        %520 = vmatprep.subr.mxu0 0.0
        %521 = vmatpush1.msra.mxu0 0.0
        %522 = vmatprep.subr.mxu0 0.0
        %523 = vmatpush1.msra.mxu0 0.0
        %524 = vmatprep.subr.mxu0 0.0
        %525 = vmatpush1.msra.mxu0 0.0
        %526 = vmatprep.subr.mxu0 0.0
        %527 = vmatpush1.msra.mxu0 0.0
        %528 = vmatprep.subr.mxu0 0.0
        %529 = vmatpush1.msra.mxu0 0.0
        %530 = vmatprep.subr.mxu0 0.0
        %531 = vmatpush1.msra.mxu0 0.0
        %532 = vmatprep.subr.mxu0 0.0
        %533 = vmatpush1.msra.mxu0 0.0
        %534 = vmatprep.subr.mxu0 0.0
        %535 = vmatpush1.msra.mxu0 0.0
        %536 = vmatprep.mubr.f32.mxu0 0.0
        %v537 = vand.u32 %v175, 4294901760
        %v538 = vsub.f32 %v175, %v537
        %539 = vmatmul.mubr.f32.gmra.mrb[0].mxu0 %v538
        %v540 = vpop.f32.mrb[0].mxu0
        %v541 = vadd.f32 %v437, %v540
        %v542 = vpop.f32.mrb[0].mxu0
        %543 = vdwg.mxu0
        %544 = vmatprep.subr.mxu0 0.0
        %v545 = vand.u32 %v177, 4294901760
        %546 = vmatpush1.msra.mxu0 %v545
        %547 = vmatprep.subr.mxu0 0.0
        %v548 = vand.u32 %v178, 4294901760
        %549 = vmatpush1.msra.mxu0 %v548
        %550 = vmatprep.subr.mxu0 0.0
        %v551 = vand.u32 %v179, 4294901760
        %552 = vmatpush1.msra.mxu0 %v551
        %553 = vmatprep.subr.mxu0 0.0
        %v554 = vand.u32 %v180, 4294901760
        %555 = vmatpush1.msra.mxu0 %v554
        %556 = vmatprep.subr.mxu0 0.0
        %v557 = vand.u32 %v181, 4294901760
        %558 = vmatpush1.msra.mxu0 %v557
        %559 = vmatprep.subr.mxu0 0.0
        %v560 = vand.u32 %v182, 4294901760
        %561 = vmatpush1.msra.mxu0 %v560
        %562 = vmatprep.subr.mxu0 0.0
        %v563 = vand.u32 %v183, 4294901760
        %564 = vmatpush1.msra.mxu0 %v563
        %565 = vmatprep.subr.mxu0 0.0
        %v566 = vand.u32 %v184, 4294901760
        %567 = vmatpush1.msra.mxu0 %v566
        %568 = vmatprep.subr.mxu0 0.0
        %v569 = vand.u32 %v185, 4294901760
        %570 = vmatpush1.msra.mxu0 %v569
        %571 = vmatprep.subr.mxu0 0.0
        %v572 = vand.u32 %v186, 4294901760
        %573 = vmatpush1.msra.mxu0 %v572
        %574 = vmatprep.subr.mxu0 0.0
        %v575 = vand.u32 %v187, 4294901760
        %576 = vmatpush1.msra.mxu0 %v575
        %577 = vmatprep.subr.mxu0 0.0
        %v578 = vand.u32 %v188, 4294901760
        %579 = vmatpush1.msra.mxu0 %v578
        %580 = vmatprep.subr.mxu0 0.0
        %v581 = vand.u32 %v189, 4294901760
        %582 = vmatpush1.msra.mxu0 %v581
        %583 = vmatprep.subr.mxu0 0.0
        %v584 = vand.u32 %v190, 4294901760
        %585 = vmatpush1.msra.mxu0 %v584
        %586 = vmatprep.subr.mxu0 0.0
        %v587 = vand.u32 %v191, 4294901760
        %588 = vmatpush1.msra.mxu0 %v587
        %589 = vmatprep.subr.mxu0 0.0
        %v590 = vand.u32 %v192, 4294901760
        %591 = vmatpush1.msra.mxu0 %v590
        %592 = vmatprep.subr.mxu0 0.0
        %593 = vmatpush1.msra.mxu0 0.0
        %594 = vmatprep.subr.mxu0 0.0
        %595 = vmatpush1.msra.mxu0 0.0
        %596 = vmatprep.subr.mxu0 0.0
        %597 = vmatpush1.msra.mxu0 0.0
        %598 = vmatprep.subr.mxu0 0.0
        %599 = vmatpush1.msra.mxu0 0.0
        %600 = vmatprep.subr.mxu0 0.0
        %601 = vmatpush1.msra.mxu0 0.0
        %602 = vmatprep.subr.mxu0 0.0
        %603 = vmatpush1.msra.mxu0 0.0
        %604 = vmatprep.subr.mxu0 0.0
        %605 = vmatpush1.msra.mxu0 0.0
        %606 = vmatprep.subr.mxu0 0.0
        %607 = vmatpush1.msra.mxu0 0.0
        %608 = vmatprep.subr.mxu0 0.0
        %609 = vmatpush1.msra.mxu0 0.0
        %610 = vmatprep.subr.mxu0 0.0
        %611 = vmatpush1.msra.mxu0 0.0
        %612 = vmatprep.subr.mxu0 0.0
        %613 = vmatpush1.msra.mxu0 0.0
        %614 = vmatprep.subr.mxu0 0.0
        %615 = vmatpush1.msra.mxu0 0.0
        %616 = vmatprep.subr.mxu0 0.0
        %617 = vmatpush1.msra.mxu0 0.0
        %618 = vmatprep.subr.mxu0 0.0
        %619 = vmatpush1.msra.mxu0 0.0
        %620 = vmatprep.subr.mxu0 0.0
        %621 = vmatpush1.msra.mxu0 0.0
        %622 = vmatprep.subr.mxu0 0.0
        %623 = vmatpush1.msra.mxu0 0.0
        %624 = vmatprep.mubr.f32.mxu0 0.0
        %v625 = vand.u32 %v175, 4294901760
        %v626 = vsub.f32 %v175, %v625
        %v627 = vand.u32 %v626, 4294901760
        %628 = vmatmul.mubr.f32.gmra.mrb[0].mxu0 %v627
        %v629 = vpop.f32.mrb[0].mxu0
        %v630 = vadd.f32 %v541, %v629
        %v631 = vpop.f32.mrb[0].mxu0
        %632 = vdwg.mxu0
        %633 = vmatprep.subr.mxu0 0.0
        %v634 = vand.u32 %v177, 4294901760
        %v635 = vsub.f32 %v177, %v634
        %v636 = vand.u32 %v635, 4294901760
        %637 = vmatpush1.msra.mxu0 %v636
        %638 = vmatprep.subr.mxu0 0.0
        %v639 = vand.u32 %v178, 4294901760
        %v640 = vsub.f32 %v178, %v639
        %v641 = vand.u32 %v640, 4294901760
        %642 = vmatpush1.msra.mxu0 %v641
        %643 = vmatprep.subr.mxu0 0.0
        %v644 = vand.u32 %v179, 4294901760
        %v645 = vsub.f32 %v179, %v644
        %v646 = vand.u32 %v645, 4294901760
        %647 = vmatpush1.msra.mxu0 %v646
        %648 = vmatprep.subr.mxu0 0.0
        %v649 = vand.u32 %v180, 4294901760
        %v650 = vsub.f32 %v180, %v649
        %v651 = vand.u32 %v650, 4294901760
        %652 = vmatpush1.msra.mxu0 %v651
        %653 = vmatprep.subr.mxu0 0.0
        %v654 = vand.u32 %v181, 4294901760
        %v655 = vsub.f32 %v181, %v654
        %v656 = vand.u32 %v655, 4294901760
        %657 = vmatpush1.msra.mxu0 %v656
        %658 = vmatprep.subr.mxu0 0.0
        %v659 = vand.u32 %v182, 4294901760
        %v660 = vsub.f32 %v182, %v659
        %v661 = vand.u32 %v660, 4294901760
        %662 = vmatpush1.msra.mxu0 %v661
        %663 = vmatprep.subr.mxu0 0.0
        %v664 = vand.u32 %v183, 4294901760
        %v665 = vsub.f32 %v183, %v664
        %v666 = vand.u32 %v665, 4294901760
        %667 = vmatpush1.msra.mxu0 %v666
        %668 = vmatprep.subr.mxu0 0.0
        %v669 = vand.u32 %v184, 4294901760
        %v670 = vsub.f32 %v184, %v669
        %v671 = vand.u32 %v670, 4294901760
        %672 = vmatpush1.msra.mxu0 %v671
        %673 = vmatprep.subr.mxu0 0.0
        %v674 = vand.u32 %v185, 4294901760
        %v675 = vsub.f32 %v185, %v674
        %v676 = vand.u32 %v675, 4294901760
        %677 = vmatpush1.msra.mxu0 %v676
        %678 = vmatprep.subr.mxu0 0.0
        %v679 = vand.u32 %v186, 4294901760
        %v680 = vsub.f32 %v186, %v679
        %v681 = vand.u32 %v680, 4294901760
        %682 = vmatpush1.msra.mxu0 %v681
        %683 = vmatprep.subr.mxu0 0.0
        %v684 = vand.u32 %v187, 4294901760
        %v685 = vsub.f32 %v187, %v684
        %v686 = vand.u32 %v685, 4294901760
        %687 = vmatpush1.msra.mxu0 %v686
        %688 = vmatprep.subr.mxu0 0.0
        %v689 = vand.u32 %v188, 4294901760
        %v690 = vsub.f32 %v188, %v689
        %v691 = vand.u32 %v690, 4294901760
        %692 = vmatpush1.msra.mxu0 %v691
        %693 = vmatprep.subr.mxu0 0.0
        %v694 = vand.u32 %v189, 4294901760
        %v695 = vsub.f32 %v189, %v694
        %v696 = vand.u32 %v695, 4294901760
        %697 = vmatpush1.msra.mxu0 %v696
        %698 = vmatprep.subr.mxu0 0.0
        %v699 = vand.u32 %v190, 4294901760
        %v700 = vsub.f32 %v190, %v699
        %v701 = vand.u32 %v700, 4294901760
        %702 = vmatpush1.msra.mxu0 %v701
        %703 = vmatprep.subr.mxu0 0.0
        %v704 = vand.u32 %v191, 4294901760
        %v705 = vsub.f32 %v191, %v704
        %v706 = vand.u32 %v705, 4294901760
        %707 = vmatpush1.msra.mxu0 %v706
        %708 = vmatprep.subr.mxu0 0.0
        %v709 = vand.u32 %v192, 4294901760
        %v710 = vsub.f32 %v192, %v709
        %v711 = vand.u32 %v710, 4294901760
        %712 = vmatpush1.msra.mxu0 %v711
        %713 = vmatprep.subr.mxu0 0.0
        %714 = vmatpush1.msra.mxu0 0.0
        %715 = vmatprep.subr.mxu0 0.0
        %716 = vmatpush1.msra.mxu0 0.0
        %717 = vmatprep.subr.mxu0 0.0
        %718 = vmatpush1.msra.mxu0 0.0
        %719 = vmatprep.subr.mxu0 0.0
        %720 = vmatpush1.msra.mxu0 0.0
        %721 = vmatprep.subr.mxu0 0.0
        %722 = vmatpush1.msra.mxu0 0.0
        %723 = vmatprep.subr.mxu0 0.0
        %724 = vmatpush1.msra.mxu0 0.0
        %725 = vmatprep.subr.mxu0 0.0
        %726 = vmatpush1.msra.mxu0 0.0
        %727 = vmatprep.subr.mxu0 0.0
        %728 = vmatpush1.msra.mxu0 0.0
        %729 = vmatprep.subr.mxu0 0.0
        %730 = vmatpush1.msra.mxu0 0.0
        %731 = vmatprep.subr.mxu0 0.0
        %732 = vmatpush1.msra.mxu0 0.0
        %733 = vmatprep.subr.mxu0 0.0
        %734 = vmatpush1.msra.mxu0 0.0
        %735 = vmatprep.subr.mxu0 0.0
        %736 = vmatpush1.msra.mxu0 0.0
        %737 = vmatprep.subr.mxu0 0.0
        %738 = vmatpush1.msra.mxu0 0.0
        %739 = vmatprep.subr.mxu0 0.0
        %740 = vmatpush1.msra.mxu0 0.0
        %741 = vmatprep.subr.mxu0 0.0
        %742 = vmatpush1.msra.mxu0 0.0
        %743 = vmatprep.subr.mxu0 0.0
        %744 = vmatpush1.msra.mxu0 0.0
        %745 = vmatprep.mubr.f32.mxu0 0.0
        %v746 = vand.u32 %v175, 4294901760
        %747 = vmatmul.mubr.f32.gmra.mrb[0].mxu0 %v746
        %v748 = vpop.f32.mrb[0].mxu0
        %v749 = vadd.f32 %v630, %v748
        %v750 = vpop.f32.mrb[0].mxu0
        %751 = vdwg.mxu0
        %752 = vmatprep.subr.mxu0 0.0
        %v753 = vand.u32 %v177, 4294901760
        %754 = vmatpush1.msra.mxu0 %v753
        %755 = vmatprep.subr.mxu0 0.0
        %v756 = vand.u32 %v178, 4294901760
        %757 = vmatpush1.msra.mxu0 %v756
        %758 = vmatprep.subr.mxu0 0.0
        %v759 = vand.u32 %v179, 4294901760
        %760 = vmatpush1.msra.mxu0 %v759
        %761 = vmatprep.subr.mxu0 0.0
        %v762 = vand.u32 %v180, 4294901760
        %763 = vmatpush1.msra.mxu0 %v762
        %764 = vmatprep.subr.mxu0 0.0
        %v765 = vand.u32 %v181, 4294901760
        %766 = vmatpush1.msra.mxu0 %v765
        %767 = vmatprep.subr.mxu0 0.0
        %v768 = vand.u32 %v182, 4294901760
        %769 = vmatpush1.msra.mxu0 %v768
        %770 = vmatprep.subr.mxu0 0.0
        %v771 = vand.u32 %v183, 4294901760
        %772 = vmatpush1.msra.mxu0 %v771
        %773 = vmatprep.subr.mxu0 0.0
        %v774 = vand.u32 %v184, 4294901760
        %775 = vmatpush1.msra.mxu0 %v774
        %776 = vmatprep.subr.mxu0 0.0
        %v777 = vand.u32 %v185, 4294901760
        %778 = vmatpush1.msra.mxu0 %v777
        %779 = vmatprep.subr.mxu0 0.0
        %v780 = vand.u32 %v186, 4294901760
        %781 = vmatpush1.msra.mxu0 %v780
        %782 = vmatprep.subr.mxu0 0.0
        %v783 = vand.u32 %v187, 4294901760
        %784 = vmatpush1.msra.mxu0 %v783
        %785 = vmatprep.subr.mxu0 0.0
        %v786 = vand.u32 %v188, 4294901760
        %787 = vmatpush1.msra.mxu0 %v786
        %788 = vmatprep.subr.mxu0 0.0
        %v789 = vand.u32 %v189, 4294901760
        %790 = vmatpush1.msra.mxu0 %v789
        %791 = vmatprep.subr.mxu0 0.0
        %v792 = vand.u32 %v190, 4294901760
        %793 = vmatpush1.msra.mxu0 %v792
        %794 = vmatprep.subr.mxu0 0.0
        %v795 = vand.u32 %v191, 4294901760
        %796 = vmatpush1.msra.mxu0 %v795
        %797 = vmatprep.subr.mxu0 0.0
        %v798 = vand.u32 %v192, 4294901760
        %799 = vmatpush1.msra.mxu0 %v798
        %800 = vmatprep.subr.mxu0 0.0
        %801 = vmatpush1.msra.mxu0 0.0
        %802 = vmatprep.subr.mxu0 0.0
        %803 = vmatpush1.msra.mxu0 0.0
        %804 = vmatprep.subr.mxu0 0.0
        %805 = vmatpush1.msra.mxu0 0.0
        %806 = vmatprep.subr.mxu0 0.0
        %807 = vmatpush1.msra.mxu0 0.0
        %808 = vmatprep.subr.mxu0 0.0
        %809 = vmatpush1.msra.mxu0 0.0
        %810 = vmatprep.subr.mxu0 0.0
        %811 = vmatpush1.msra.mxu0 0.0
        %812 = vmatprep.subr.mxu0 0.0
        %813 = vmatpush1.msra.mxu0 0.0
        %814 = vmatprep.subr.mxu0 0.0
        %815 = vmatpush1.msra.mxu0 0.0
        %816 = vmatprep.subr.mxu0 0.0
        %817 = vmatpush1.msra.mxu0 0.0
        %818 = vmatprep.subr.mxu0 0.0
        %819 = vmatpush1.msra.mxu0 0.0
        %820 = vmatprep.subr.mxu0 0.0
        %821 = vmatpush1.msra.mxu0 0.0
        %822 = vmatprep.subr.mxu0 0.0
        %823 = vmatpush1.msra.mxu0 0.0
        %824 = vmatprep.subr.mxu0 0.0
        %825 = vmatpush1.msra.mxu0 0.0
        %826 = vmatprep.subr.mxu0 0.0
        %827 = vmatpush1.msra.mxu0 0.0
        %828 = vmatprep.subr.mxu0 0.0
        %829 = vmatpush1.msra.mxu0 0.0
        %830 = vmatprep.subr.mxu0 0.0
        %831 = vmatpush1.msra.mxu0 0.0
        %832 = vmatprep.mubr.f32.mxu0 0.0
        %v833 = vand.u32 %v175, 4294901760
        %834 = vmatmul.mubr.f32.gmra.mrb[0].mxu0 %v833
        %v835 = vpop.f32.mrb[0].mxu0
        %v836 = vadd.f32 %v749, %v835
        %v837 = vpop.f32.mrb[0].mxu0
        %838 = vdwg.mxu0
        %v839 = vsub.f32 %v194, 1.0
        %v840 = vmul.f32 %v193, %v839
        %v841 = vadd.f32 %v840, %v176
        %v842 = vmul.f32 %v841, -0.01
        %843 = vst [vmem:[%s174] sm:$0xff] %v836
        %844 = vst [vmem:[%s174 + $0x8] sm:$0xff] %v842
        %s845 = sand.u32 %s75, 1
        %s846 = scalar_lea.sflag [#allocation4], %s845
        %s847 = sand.u32 %s75, 1
        %s848 = smul.addr %s847, 16
        %s849 = scalar_lea.vmem [#allocation7], %s848
        // Predicated region
        $region37: #{tpu_custom_call.1} parent=27 // pred_check
          %p850 = pneg %p85
        $region38: #{tpu_custom_call.1} parent=27 // pred_check_branch
          %852 = sbr.rel (%p850) target = $region40
        $region39: #{tpu_custom_call.1} parent=27 // pred_region
          %s854 = ssub.s32 256, 256
          %855 = vsyncadd %s846, %s854
          %s856 = smul.addr %s20, 2
          %s857 = smul.addr %s856, 128
          %s858 = scalar_lea.hbm %s2, %s857
          %s860 = sshll.u32 %s849, 4
          %s861 = int_to_ptr.vmem [resolvable:$true] %s860
          %863 = dma.vmem_to_hbm [thread:$0]  %s861, 256, %s858, %s846
        $region40: #{tpu_custom_call.1} parent=27 // pred_fallthru
          _
      $region28: #{tpu_custom_call.1} parent=5 // pred_fallthru
        _
      %p864 = scmp.le.s32.totalorder 2, %s15
      // Predicated region
      $region41: #{tpu_custom_call.1} parent=5 // pred_check
        %p865 = pneg %p864
      $region42: #{tpu_custom_call.1} parent=5 // pred_check_branch
        %867 = sbr.rel (%p865) target = $region44
      $region43: #{tpu_custom_call.1} parent=5 // pred_region
        %s868 = ssub.s32 %s15, 2
        // Predicated region
        $region45: #{tpu_custom_call.1} parent=43 // pred_check
          %p869 = pneg %p91
        $region46: #{tpu_custom_call.1} parent=43 // pred_check_branch
          %871 = sbr.rel (%p869) target = $region48
        $region47: #{tpu_custom_call.1} parent=43 // pred_region
          %s872 = sand.u32 %s76, 1
          %s873 = scalar_lea.sflag [#allocation4], %s872
          %s874 = sand.u32 %s76, 1
          %s875 = smul.addr %s874, 16
          %s876 = scalar_lea.vmem [#allocation7], %s875
          %877 = dma.done %s873, 256
        $region48: #{tpu_custom_call.1} parent=43 // pred_fallthru
          _
      $region44: #{tpu_custom_call.1} parent=5 // pred_fallthru
        _
    $region6: #{tpu_custom_call.1} parent=1 // loop_footer
      %s19 = sadd.s32 1, %s15
    $region7: #{tpu_custom_call.1} parent=1 // loop_footer_branch
      %14 = sbr.rel target = $region3
    $region8: #{tpu_custom_call.1} parent=1 // loop_exit
      _
    %878 = vsyncpa [#allocation3], 1
    %s879 = scalar_lea.sflag [#allocation3], 1
    %880 = vsyncpa %s879, 1
    %881 = vsyncpa [#allocation6], 1
    %882 = vsyncpa [#allocation4], 1
    %s883 = scalar_lea.sflag [#allocation4], 1
    %884 = vsyncpa %s883, 1

// kernel: tpu_custom_call.1
$region0: #{tpu_custom_call.1}
  #allocation0 [shape = 'u32[]', space=smem, size = 0x4, offset = 0x4, fixed_abs, tag = 'smem constant byte address 0x4 - core index']
  #allocation1 [shape = 'u32[144,128]{1,0:T(1,128)}', space=vmem, size = 0x12000, scoped, tag = 'internal scratch']
  %s0 = inlined_call_operand.hbm [shape: f32[16,256], index: 0, kind: input, shape index: {}]
  %s1 = inlined_call_operand.hbm [shape: f32[128,128], index: 1, kind: input, shape index: {}]
  %s2 = inlined_call_operand.hbm [shape: f32[16,256], index: 2, kind: output, shape index: {}]
  %s3 = sld [smem:[#allocation0]]
  $region49: #{tpu_custom_call.1} parent=0
    _
  %s5 = ssub.s32 1, %s3
  %s6 = scalar_select 0, %s5, %s3
  $region1: #{tpu_custom_call.1} parent=0
    #allocation2 [shape = 'u8[16384]{0}', space=vmem, size = 0x4000, scoped, tag = 'input window, operand 0']
    #allocation3 [shape = 's32[2]{0}', space=sflag, size = 0x8, scoped, tag = 'scoped memory for tpu_custom_call.1']
    #allocation4 [shape = 's32[2]{0}', space=sflag, size = 0x8, scoped, tag = 'scoped memory for tpu_custom_call.1']
    #allocation5 [shape = 'u8[65536]{0}', space=vmem, size = 0x10000, scoped, tag = 'input window, operand 1, single buffered']
    #allocation6 [shape = 's32[1]{0}', space=sflag, size = 0x4, scoped, tag = 'scoped memory for tpu_custom_call.1']
    #allocation7 [shape = 'u8[16384]{0}', space=vmem, size = 0x4000, scoped, tag = 'output window, operand 0']
    %7 = vsyncpa [#allocation3], 0
    %s8 = scalar_lea.sflag [#allocation3], 1
    %9 = vsyncpa %s8, 0
    %10 = vsyncpa [#allocation6], 0
    %11 = vsyncpa [#allocation4], 0
    %s12 = scalar_lea.sflag [#allocation4], 1
    %13 = vsyncpa %s12, 0
    loop: start=0, step=1, limit=4
    $region2: #{tpu_custom_call.1} parent=1 // loop_pre_header
      _
    $region3: #{tpu_custom_call.1} parent=1 // loop_header
      %s15 = sphi 0, %s19
      %p16 = scmp.ge.s32.totalorder %s15, 4
      %s25 = sphi 0, %s27
      %s28 = sphi 0, %s25
      %s29 = sphi 0, %s28
      %s45 = sphi 0, %s29
      %s49 = sphi 0, %s49
      %s51 = sphi 0, %s49
      %s52 = sphi 0, %s51
      %s66 = sphi 0, %s52
      %s72 = sphi 0, %s74
      %s75 = sphi 0, %s72
      %s76 = sphi 0, %s75
      %s92 = sphi 0, %s76
    $region4: #{tpu_custom_call.1} parent=1 // loop_header_branch
      %18 = sbr.rel (%p16) target = $region8
    $region5: #{tpu_custom_call.1} parent=1 // loop_body
      %s20 = ssub.s32 %s15, 1
      %s21 = ssub.s32 %s15, 2
      %s22 = sadd.s32 %s15, 1
      %s23 = ssub.s32 %s15, %s22
      %p24 = scmp.eq.s32.totalorder %s23, 0
      %s26 = sadd.s32 %s25, 1
      %s27 = scalar_select %p24, %s25, %s26
      %p30 = pneg %p24
      %p31 = scmp.eq.s32.totalorder %s15, 1
      %p32 = por %p30, %p31
      %p33 = scmp.ne.s32.totalorder %s25, %s28
      %p34 = scmp.eq.s32.totalorder %s15, 0
      %p35 = por %p33, %p34
      %p36 = scmp.ne.s32.totalorder %s25, %s28
      %p37 = scmp.eq.s32.totalorder %s20, 1
      %p38 = por %p36, %p37
      %p39 = scmp.ne.s32.totalorder %s28, %s29
      %p40 = scmp.eq.s32.totalorder %s20, 0
      %p41 = por %p39, %p40
      %p42 = scmp.ne.s32.totalorder %s28, %s29
      %p43 = scmp.eq.s32.totalorder %s21, 1
      %p44 = por %p42, %p43
      %p46 = scmp.ne.s32.totalorder %s29, %s45
      %p47 = scmp.eq.s32.totalorder %s21, 0
      %p48 = por %p46, %p47
      %s50 = sadd.s32 %s49, 1
      %p53 = scmp.eq.s32.totalorder %s15, 1
      %p54 = scmp.ne.s32.totalorder %s49, %s51
      %p55 = scmp.eq.s32.totalorder %s15, 0
      %p56 = por %p54, %p55
      %p57 = scmp.ne.s32.totalorder %s49, %s51
      %p58 = scmp.eq.s32.totalorder %s20, 1
      %p59 = por %p57, %p58
      %p60 = scmp.ne.s32.totalorder %s51, %s52
      %p61 = scmp.eq.s32.totalorder %s20, 0
      %p62 = por %p60, %p61
      %p63 = scmp.ne.s32.totalorder %s51, %s52
      %p64 = scmp.eq.s32.totalorder %s21, 1
      %p65 = por %p63, %p64
      %p67 = scmp.ne.s32.totalorder %s52, %s66
      %p68 = scmp.eq.s32.totalorder %s21, 0
      %p69 = por %p67, %p68
      %s70 = ssub.s32 %s15, %s22
      %p71 = scmp.eq.s32.totalorder %s70, 0
      %s73 = sadd.s32 %s72, 1
      %s74 = scalar_select %p71, %s72, %s73
      %p77 = pneg %p71
      %p78 = scmp.eq.s32.totalorder %s15, 1
      %p79 = por %p77, %p78
      %p80 = scmp.ne.s32.totalorder %s72, %s75
      %p81 = scmp.eq.s32.totalorder %s15, 0
      %p82 = por %p80, %p81
      %p83 = scmp.ne.s32.totalorder %s72, %s75
      %p84 = scmp.eq.s32.totalorder %s20, 1
      %p85 = por %p83, %p84
      %p86 = scmp.ne.s32.totalorder %s75, %s76
      %p87 = scmp.eq.s32.totalorder %s20, 0
      %p88 = por %p86, %p87
      %p89 = scmp.ne.s32.totalorder %s75, %s76
      %p90 = scmp.eq.s32.totalorder %s21, 1
      %p91 = por %p89, %p90
      %p93 = scmp.ne.s32.totalorder %s76, %s92
      %p94 = scmp.eq.s32.totalorder %s21, 0
      %p95 = por %p93, %p94
      %p96 = scmp.le.s32.totalorder 1, %s15
      %p97 = scmp.lt.s32.totalorder %s15, 3
      %p98 = pnand %p96, %p97
      %p99 = pneg %p98
      // Predicated region
      $region9: #{tpu_custom_call.1} parent=5 // pred_check
        _
      $region10: #{tpu_custom_call.1} parent=5 // pred_check_branch
        %101 = sbr.rel (%p98) target = $region12
      $region11: #{tpu_custom_call.1} parent=5 // pred_region
        %s102 = ssub.s32 %s15, 1
        // Predicated region
        $region13: #{tpu_custom_call.1} parent=11 // pred_check
          %p103 = pneg %p62
        $region14: #{tpu_custom_call.1} parent=11 // pred_check_branch
          %105 = sbr.rel (%p103) target = $region16
        $region15: #{tpu_custom_call.1} parent=11 // pred_region
          %s107 = ssub.s32 2048, 2048
          %108 = vsyncadd [#allocation6], %s107
          %s109 = sshll.u32 [#allocation5], 4
          %s110 = int_to_ptr.vmem [resolvable:$true] %s109
          %115 = dma.hbm_to_vmem [thread:$0]  %s1, 2048, %s110, [#allocation6], 128, 128, 8
        $region16: #{tpu_custom_call.1} parent=11 // pred_fallthru
          _
      $region12: #{tpu_custom_call.1} parent=5 // pred_fallthru
        _
      %p116 = scmp.lt.s32.totalorder %s15, 2
      // Predicated region
      $region17: #{tpu_custom_call.1} parent=5 // pred_check
        %p117 = pneg %p116
      $region18: #{tpu_custom_call.1} parent=5 // pred_check_branch
        %119 = sbr.rel (%p117) target = $region20
      $region19: #{tpu_custom_call.1} parent=5 // pred_region
        // Predicated region
        $region21: #{tpu_custom_call.1} parent=19 // pred_check
          %p120 = pneg %p35
        $region22: #{tpu_custom_call.1} parent=19 // pred_check_branch
          %122 = sbr.rel (%p120) target = $region24
        $region23: #{tpu_custom_call.1} parent=19 // pred_region
          %s123 = sand.u32 %s25, 1
          %s124 = scalar_lea.sflag [#allocation3], %s123
          %s125 = sand.u32 %s25, 1
          %s126 = smul.addr %s125, 16
          %s127 = scalar_lea.vmem [#allocation2], %s126
          %s129 = ssub.s32 256, 256
          %130 = vsyncadd %s124, %s129
          %s131 = smul.addr %s15, 2
          %s132 = smul.addr %s131, 128
          %s133 = scalar_lea.hbm %s0, %s132
          %s135 = sshll.u32 %s127, 4
          %s136 = int_to_ptr.vmem [resolvable:$true] %s135
          %138 = dma.hbm_to_vmem [thread:$0]  %s133, 256, %s136, %s124
        $region24: #{tpu_custom_call.1} parent=19 // pred_fallthru
          _
      $region20: #{tpu_custom_call.1} parent=5 // pred_fallthru
        _
      %p139 = scmp.le.s32.totalorder 1, %s15
      %p140 = scmp.lt.s32.totalorder %s15, 3
      %p141 = pnand %p139, %p140
      %p142 = pneg %p141
      // Predicated region
      $region25: #{tpu_custom_call.1} parent=5 // pred_check
        _
      $region26: #{tpu_custom_call.1} parent=5 // pred_check_branch
        %144 = sbr.rel (%p141) target = $region28
      $region27: #{tpu_custom_call.1} parent=5 // pred_region
        %s145 = ssub.s32 %s15, 1
        %s146 = sand.u32 %s28, 1
        %s147 = scalar_lea.sflag [#allocation3], %s146
        %s148 = sand.u32 %s28, 1
        %s149 = smul.addr %s148, 16
        %s150 = scalar_lea.vmem [#allocation2], %s149
        // Predicated region
        $region29: #{tpu_custom_call.1} parent=27 // pred_check
          %p151 = pneg %p41
        $region30: #{tpu_custom_call.1} parent=27 // pred_check_branch
          %153 = sbr.rel (%p151) target = $region32
        $region31: #{tpu_custom_call.1} parent=27 // pred_region
          %154 = dma.done %s147, 256
        $region32: #{tpu_custom_call.1} parent=27 // pred_fallthru
          _
        // Predicated region
        $region33: #{tpu_custom_call.1} parent=27 // pred_check
          %p155 = pneg %p62
        $region34: #{tpu_custom_call.1} parent=27 // pred_check_branch
          %157 = sbr.rel (%p155) target = $region36
        $region35: #{tpu_custom_call.1} parent=27 // pred_region
          %158 = dma.done [#allocation6], 2048
        $region36: #{tpu_custom_call.1} parent=27 // pred_fallthru
          _
        %s159 = sand.u32 %s28, 1
        %s160 = scalar_lea.sflag [#allocation3], %s159
        %s161 = sand.u32 %s28, 1
        %s162 = smul.addr %s161, 16
        %s163 = scalar_lea.vmem [#allocation2], %s162
        %p164 = pneg %p41
        %p165 = pneg %p38
        %p166 = pneg %p62
        %p167 = pneg %p59
        %p168 = pneg %p88
        %p169 = pneg %p85
        %s170 = sand.u32 %s75, 1
        %s171 = scalar_lea.sflag [#allocation4], %s170
        %s172 = sand.u32 %s75, 1
        %s173 = smul.addr %s172, 16
        %s174 = scalar_lea.vmem [#allocation7], %s173
        %v175 = vld [vmem:[%s150] sm:$0xff]
        %v176 = vld [vmem:[%s150 + $0x8] sm:$0xff]
        %v177 = vld [vmem:[#allocation5] sm:$0xff]
        %v178 = vld [vmem:[#allocation5 + $0x8] sm:$0xff]
        %v179 = vld [vmem:[#allocation5 + $0x10] sm:$0xff]
        %v180 = vld [vmem:[#allocation5 + $0x18] sm:$0xff]
        %v181 = vld [vmem:[#allocation5 + $0x20] sm:$0xff]
        %v182 = vld [vmem:[#allocation5 + $0x28] sm:$0xff]
        %v183 = vld [vmem:[#allocation5 + $0x30] sm:$0xff]
        %v184 = vld [vmem:[#allocation5 + $0x38] sm:$0xff]
        %v185 = vld [vmem:[#allocation5 + $0x40] sm:$0xff]
        %v186 = vld [vmem:[#allocation5 + $0x48] sm:$0xff]
        %v187 = vld [vmem:[#allocation5 + $0x50] sm:$0xff]
        %v188 = vld [vmem:[#allocation5 + $0x58] sm:$0xff]
        %v189 = vld [vmem:[#allocation5 + $0x60] sm:$0xff]
        %v190 = vld [vmem:[#allocation5 + $0x68] sm:$0xff]
        %v191 = vld [vmem:[#allocation5 + $0x70] sm:$0xff]
        %v192 = vld [vmem:[#allocation5 + $0x78] sm:$0xff]
        %v193 = vmul.f32 %v175, 8.0
        %v194 = vsub.f32 %v175, 0.15
        %v195 = vsub.f32 1.0, %v175
        %v196 = vmul.f32 %v193, %v195
        %v197 = vmul.f32 %v196, %v194
        %198 = vmatprep.subr.mxu0 0.0
        %v199 = vand.u32 %v177, 4294901760
        %200 = vmatpush1.msra.mxu0 %v199
        %201 = vmatprep.subr.mxu0 0.0
        %v202 = vand.u32 %v178, 4294901760
        %203 = vmatpush1.msra.mxu0 %v202
        %204 = vmatprep.subr.mxu0 0.0
        %v205 = vand.u32 %v179, 4294901760
        %206 = vmatpush1.msra.mxu0 %v205
        %207 = vmatprep.subr.mxu0 0.0
        %v208 = vand.u32 %v180, 4294901760
        %209 = vmatpush1.msra.mxu0 %v208
        %210 = vmatprep.subr.mxu0 0.0
        %v211 = vand.u32 %v181, 4294901760
        %212 = vmatpush1.msra.mxu0 %v211
        %213 = vmatprep.subr.mxu0 0.0
        %v214 = vand.u32 %v182, 4294901760
        %215 = vmatpush1.msra.mxu0 %v214
        %216 = vmatprep.subr.mxu0 0.0
        %v217 = vand.u32 %v183, 4294901760
        %218 = vmatpush1.msra.mxu0 %v217
        %219 = vmatprep.subr.mxu0 0.0
        %v220 = vand.u32 %v184, 4294901760
        %221 = vmatpush1.msra.mxu0 %v220
        %222 = vmatprep.subr.mxu0 0.0
        %v223 = vand.u32 %v185, 4294901760
        %224 = vmatpush1.msra.mxu0 %v223
        %225 = vmatprep.subr.mxu0 0.0
        %v226 = vand.u32 %v186, 4294901760
        %227 = vmatpush1.msra.mxu0 %v226
        %228 = vmatprep.subr.mxu0 0.0
        %v229 = vand.u32 %v187, 4294901760
        %230 = vmatpush1.msra.mxu0 %v229
        %231 = vmatprep.subr.mxu0 0.0
        %v232 = vand.u32 %v188, 4294901760
        %233 = vmatpush1.msra.mxu0 %v232
        %234 = vmatprep.subr.mxu0 0.0
        %v235 = vand.u32 %v189, 4294901760
        %236 = vmatpush1.msra.mxu0 %v235
        %237 = vmatprep.subr.mxu0 0.0
        %v238 = vand.u32 %v190, 4294901760
        %239 = vmatpush1.msra.mxu0 %v238
        %240 = vmatprep.subr.mxu0 0.0
        %v241 = vand.u32 %v191, 4294901760
        %242 = vmatpush1.msra.mxu0 %v241
        %243 = vmatprep.subr.mxu0 0.0
        %v244 = vand.u32 %v192, 4294901760
        %245 = vmatpush1.msra.mxu0 %v244
        %246 = vmatprep.subr.mxu0 0.0
        %247 = vmatpush1.msra.mxu0 0.0
        %248 = vmatprep.subr.mxu0 0.0
        %249 = vmatpush1.msra.mxu0 0.0
        %250 = vmatprep.subr.mxu0 0.0
        %251 = vmatpush1.msra.mxu0 0.0
        %252 = vmatprep.subr.mxu0 0.0
        %253 = vmatpush1.msra.mxu0 0.0
        %254 = vmatprep.subr.mxu0 0.0
        %255 = vmatpush1.msra.mxu0 0.0
        %256 = vmatprep.subr.mxu0 0.0
        %257 = vmatpush1.msra.mxu0 0.0
        %258 = vmatprep.subr.mxu0 0.0
        %259 = vmatpush1.msra.mxu0 0.0
        %260 = vmatprep.subr.mxu0 0.0
        %261 = vmatpush1.msra.mxu0 0.0
        %262 = vmatprep.subr.mxu0 0.0
        %263 = vmatpush1.msra.mxu0 0.0
        %264 = vmatprep.subr.mxu0 0.0
        %265 = vmatpush1.msra.mxu0 0.0
        %266 = vmatprep.subr.mxu0 0.0
        %267 = vmatpush1.msra.mxu0 0.0
        %268 = vmatprep.subr.mxu0 0.0
        %269 = vmatpush1.msra.mxu0 0.0
        %270 = vmatprep.subr.mxu0 0.0
        %271 = vmatpush1.msra.mxu0 0.0
        %272 = vmatprep.subr.mxu0 0.0
        %273 = vmatpush1.msra.mxu0 0.0
        %274 = vmatprep.subr.mxu0 0.0
        %275 = vmatpush1.msra.mxu0 0.0
        %276 = vmatprep.subr.mxu0 0.0
        %277 = vmatpush1.msra.mxu0 0.0
        %278 = vmatprep.mubr.f32.mxu0 0.0
        %v279 = vand.u32 %v175, 4294901760
        %v280 = vsub.f32 %v175, %v279
        %v281 = vand.u32 %v280, 4294901760
        %v282 = vsub.f32 %v280, %v281
        %v283 = vand.u32 %v282, 4294901760
        %284 = vmatmul.mubr.f32.gmra.mrb[0].mxu0 %v283
        %v285 = vpop.f32.mrb[0].mxu0
        %v286 = vadd.f32 %v197, %v285
        %v287 = vpop.f32.mrb[0].mxu0
        %288 = vdwg.mxu0
        %289 = vmatprep.subr.mxu0 0.0
        %v290 = vand.u32 %v177, 4294901760
        %v291 = vsub.f32 %v177, %v290
        %v292 = vand.u32 %v291, 4294901760
        %v293 = vsub.f32 %v291, %v292
        %v294 = vand.u32 %v293, 4294901760
        %295 = vmatpush1.msra.mxu0 %v294
        %296 = vmatprep.subr.mxu0 0.0
        %v297 = vand.u32 %v178, 4294901760
        %v298 = vsub.f32 %v178, %v297
        %v299 = vand.u32 %v298, 4294901760
        %v300 = vsub.f32 %v298, %v299
        %v301 = vand.u32 %v300, 4294901760
        %302 = vmatpush1.msra.mxu0 %v301
        %303 = vmatprep.subr.mxu0 0.0
        %v304 = vand.u32 %v179, 4294901760
        %v305 = vsub.f32 %v179, %v304
        %v306 = vand.u32 %v305, 4294901760
        %v307 = vsub.f32 %v305, %v306
        %v308 = vand.u32 %v307, 4294901760
        %309 = vmatpush1.msra.mxu0 %v308
        %310 = vmatprep.subr.mxu0 0.0
        %v311 = vand.u32 %v180, 4294901760
        %v312 = vsub.f32 %v180, %v311
        %v313 = vand.u32 %v312, 4294901760
        %v314 = vsub.f32 %v312, %v313
        %v315 = vand.u32 %v314, 4294901760
        %316 = vmatpush1.msra.mxu0 %v315
        %317 = vmatprep.subr.mxu0 0.0
        %v318 = vand.u32 %v181, 4294901760
        %v319 = vsub.f32 %v181, %v318
        %v320 = vand.u32 %v319, 4294901760
        %v321 = vsub.f32 %v319, %v320
        %v322 = vand.u32 %v321, 4294901760
        %323 = vmatpush1.msra.mxu0 %v322
        %324 = vmatprep.subr.mxu0 0.0
        %v325 = vand.u32 %v182, 4294901760
        %v326 = vsub.f32 %v182, %v325
        %v327 = vand.u32 %v326, 4294901760
        %v328 = vsub.f32 %v326, %v327
        %v329 = vand.u32 %v328, 4294901760
        %330 = vmatpush1.msra.mxu0 %v329
        %331 = vmatprep.subr.mxu0 0.0
        %v332 = vand.u32 %v183, 4294901760
        %v333 = vsub.f32 %v183, %v332
        %v334 = vand.u32 %v333, 4294901760
        %v335 = vsub.f32 %v333, %v334
        %v336 = vand.u32 %v335, 4294901760
        %337 = vmatpush1.msra.mxu0 %v336
        %338 = vmatprep.subr.mxu0 0.0
        %v339 = vand.u32 %v184, 4294901760
        %v340 = vsub.f32 %v184, %v339
        %v341 = vand.u32 %v340, 4294901760
        %v342 = vsub.f32 %v340, %v341
        %v343 = vand.u32 %v342, 4294901760
        %344 = vmatpush1.msra.mxu0 %v343
        %345 = vmatprep.subr.mxu0 0.0
        %v346 = vand.u32 %v185, 4294901760
        %v347 = vsub.f32 %v185, %v346
        %v348 = vand.u32 %v347, 4294901760
        %v349 = vsub.f32 %v347, %v348
        %v350 = vand.u32 %v349, 4294901760
        %351 = vmatpush1.msra.mxu0 %v350
        %352 = vmatprep.subr.mxu0 0.0
        %v353 = vand.u32 %v186, 4294901760
        %v354 = vsub.f32 %v186, %v353
        %v355 = vand.u32 %v354, 4294901760
        %v356 = vsub.f32 %v354, %v355
        %v357 = vand.u32 %v356, 4294901760
        %358 = vmatpush1.msra.mxu0 %v357
        %359 = vmatprep.subr.mxu0 0.0
        %v360 = vand.u32 %v187, 4294901760
        %v361 = vsub.f32 %v187, %v360
        %v362 = vand.u32 %v361, 4294901760
        %v363 = vsub.f32 %v361, %v362
        %v364 = vand.u32 %v363, 4294901760
        %365 = vmatpush1.msra.mxu0 %v364
        %366 = vmatprep.subr.mxu0 0.0
        %v367 = vand.u32 %v188, 4294901760
        %v368 = vsub.f32 %v188, %v367
        %v369 = vand.u32 %v368, 4294901760
        %v370 = vsub.f32 %v368, %v369
        %v371 = vand.u32 %v370, 4294901760
        %372 = vmatpush1.msra.mxu0 %v371
        %373 = vmatprep.subr.mxu0 0.0
        %v374 = vand.u32 %v189, 4294901760
        %v375 = vsub.f32 %v189, %v374
        %v376 = vand.u32 %v375, 4294901760
        %v377 = vsub.f32 %v375, %v376
        %v378 = vand.u32 %v377, 4294901760
        %379 = vmatpush1.msra.mxu0 %v378
        %380 = vmatprep.subr.mxu0 0.0
        %v381 = vand.u32 %v190, 4294901760
        %v382 = vsub.f32 %v190, %v381
        %v383 = vand.u32 %v382, 4294901760
        %v384 = vsub.f32 %v382, %v383
        %v385 = vand.u32 %v384, 4294901760
        %386 = vmatpush1.msra.mxu0 %v385
        %387 = vmatprep.subr.mxu0 0.0
        %v388 = vand.u32 %v191, 4294901760
        %v389 = vsub.f32 %v191, %v388
        %v390 = vand.u32 %v389, 4294901760
        %v391 = vsub.f32 %v389, %v390
        %v392 = vand.u32 %v391, 4294901760
        %393 = vmatpush1.msra.mxu0 %v392
        %394 = vmatprep.subr.mxu0 0.0
        %v395 = vand.u32 %v192, 4294901760
        %v396 = vsub.f32 %v192, %v395
        %v397 = vand.u32 %v396, 4294901760
        %v398 = vsub.f32 %v396, %v397
        %v399 = vand.u32 %v398, 4294901760
        %400 = vmatpush1.msra.mxu0 %v399
        %401 = vmatprep.subr.mxu0 0.0
        %402 = vmatpush1.msra.mxu0 0.0
        %403 = vmatprep.subr.mxu0 0.0
        %404 = vmatpush1.msra.mxu0 0.0
        %405 = vmatprep.subr.mxu0 0.0
        %406 = vmatpush1.msra.mxu0 0.0
        %407 = vmatprep.subr.mxu0 0.0
        %408 = vmatpush1.msra.mxu0 0.0
        %409 = vmatprep.subr.mxu0 0.0
        %410 = vmatpush1.msra.mxu0 0.0
        %411 = vmatprep.subr.mxu0 0.0
        %412 = vmatpush1.msra.mxu0 0.0
        %413 = vmatprep.subr.mxu0 0.0
        %414 = vmatpush1.msra.mxu0 0.0
        %415 = vmatprep.subr.mxu0 0.0
        %416 = vmatpush1.msra.mxu0 0.0
        %417 = vmatprep.subr.mxu0 0.0
        %418 = vmatpush1.msra.mxu0 0.0
        %419 = vmatprep.subr.mxu0 0.0
        %420 = vmatpush1.msra.mxu0 0.0
        %421 = vmatprep.subr.mxu0 0.0
        %422 = vmatpush1.msra.mxu0 0.0
        %423 = vmatprep.subr.mxu0 0.0
        %424 = vmatpush1.msra.mxu0 0.0
        %425 = vmatprep.subr.mxu0 0.0
        %426 = vmatpush1.msra.mxu0 0.0
        %427 = vmatprep.subr.mxu0 0.0
        %428 = vmatpush1.msra.mxu0 0.0
        %429 = vmatprep.subr.mxu0 0.0
        %430 = vmatpush1.msra.mxu0 0.0
        %431 = vmatprep.subr.mxu0 0.0
        %432 = vmatpush1.msra.mxu0 0.0
        %433 = vmatprep.mubr.f32.mxu0 0.0
        %v434 = vand.u32 %v175, 4294901760
        %435 = vmatmul.mubr.f32.gmra.mrb[0].mxu0 %v434
        %v436 = vpop.f32.mrb[0].mxu0
        %v437 = vadd.f32 %v286, %v436
        %v438 = vpop.f32.mrb[0].mxu0
        %439 = vdwg.mxu0
        %440 = vmatprep.subr.mxu0 0.0
        %v441 = vand.u32 %v177, 4294901760
        %v442 = vsub.f32 %v177, %v441
        %443 = vmatpush1.msra.mxu0 %v442
        %444 = vmatprep.subr.mxu0 0.0
        %v445 = vand.u32 %v178, 4294901760
        %v446 = vsub.f32 %v178, %v445
        %447 = vmatpush1.msra.mxu0 %v446
        %448 = vmatprep.subr.mxu0 0.0
        %v449 = vand.u32 %v179, 4294901760
        %v450 = vsub.f32 %v179, %v449
        %451 = vmatpush1.msra.mxu0 %v450
        %452 = vmatprep.subr.mxu0 0.0
        %v453 = vand.u32 %v180, 4294901760
        %v454 = vsub.f32 %v180, %v453
        %455 = vmatpush1.msra.mxu0 %v454
        %456 = vmatprep.subr.mxu0 0.0
        %v457 = vand.u32 %v181, 4294901760
        %v458 = vsub.f32 %v181, %v457
        %459 = vmatpush1.msra.mxu0 %v458
        %460 = vmatprep.subr.mxu0 0.0
        %v461 = vand.u32 %v182, 4294901760
        %v462 = vsub.f32 %v182, %v461
        %463 = vmatpush1.msra.mxu0 %v462
        %464 = vmatprep.subr.mxu0 0.0
        %v465 = vand.u32 %v183, 4294901760
        %v466 = vsub.f32 %v183, %v465
        %467 = vmatpush1.msra.mxu0 %v466
        %468 = vmatprep.subr.mxu0 0.0
        %v469 = vand.u32 %v184, 4294901760
        %v470 = vsub.f32 %v184, %v469
        %471 = vmatpush1.msra.mxu0 %v470
        %472 = vmatprep.subr.mxu0 0.0
        %v473 = vand.u32 %v185, 4294901760
        %v474 = vsub.f32 %v185, %v473
        %475 = vmatpush1.msra.mxu0 %v474
        %476 = vmatprep.subr.mxu0 0.0
        %v477 = vand.u32 %v186, 4294901760
        %v478 = vsub.f32 %v186, %v477
        %479 = vmatpush1.msra.mxu0 %v478
        %480 = vmatprep.subr.mxu0 0.0
        %v481 = vand.u32 %v187, 4294901760
        %v482 = vsub.f32 %v187, %v481
        %483 = vmatpush1.msra.mxu0 %v482
        %484 = vmatprep.subr.mxu0 0.0
        %v485 = vand.u32 %v188, 4294901760
        %v486 = vsub.f32 %v188, %v485
        %487 = vmatpush1.msra.mxu0 %v486
        %488 = vmatprep.subr.mxu0 0.0
        %v489 = vand.u32 %v189, 4294901760
        %v490 = vsub.f32 %v189, %v489
        %491 = vmatpush1.msra.mxu0 %v490
        %492 = vmatprep.subr.mxu0 0.0
        %v493 = vand.u32 %v190, 4294901760
        %v494 = vsub.f32 %v190, %v493
        %495 = vmatpush1.msra.mxu0 %v494
        %496 = vmatprep.subr.mxu0 0.0
        %v497 = vand.u32 %v191, 4294901760
        %v498 = vsub.f32 %v191, %v497
        %499 = vmatpush1.msra.mxu0 %v498
        %500 = vmatprep.subr.mxu0 0.0
        %v501 = vand.u32 %v192, 4294901760
        %v502 = vsub.f32 %v192, %v501
        %503 = vmatpush1.msra.mxu0 %v502
        %504 = vmatprep.subr.mxu0 0.0
        %505 = vmatpush1.msra.mxu0 0.0
        %506 = vmatprep.subr.mxu0 0.0
        %507 = vmatpush1.msra.mxu0 0.0
        %508 = vmatprep.subr.mxu0 0.0
        %509 = vmatpush1.msra.mxu0 0.0
        %510 = vmatprep.subr.mxu0 0.0
        %511 = vmatpush1.msra.mxu0 0.0
        %512 = vmatprep.subr.mxu0 0.0
        %513 = vmatpush1.msra.mxu0 0.0
        %514 = vmatprep.subr.mxu0 0.0
        %515 = vmatpush1.msra.mxu0 0.0
        %516 = vmatprep.subr.mxu0 0.0
        %517 = vmatpush1.msra.mxu0 0.0
        %518 = vmatprep.subr.mxu0 0.0
        %519 = vmatpush1.msra.mxu0 0.0
        %520 = vmatprep.subr.mxu0 0.0
        %521 = vmatpush1.msra.mxu0 0.0
        %522 = vmatprep.subr.mxu0 0.0
        %523 = vmatpush1.msra.mxu0 0.0
        %524 = vmatprep.subr.mxu0 0.0
        %525 = vmatpush1.msra.mxu0 0.0
        %526 = vmatprep.subr.mxu0 0.0
        %527 = vmatpush1.msra.mxu0 0.0
        %528 = vmatprep.subr.mxu0 0.0
        %529 = vmatpush1.msra.mxu0 0.0
        %530 = vmatprep.subr.mxu0 0.0
        %531 = vmatpush1.msra.mxu0 0.0
        %532 = vmatprep.subr.mxu0 0.0
        %533 = vmatpush1.msra.mxu0 0.0
        %534 = vmatprep.subr.mxu0 0.0
        %535 = vmatpush1.msra.mxu0 0.0
        %536 = vmatprep.mubr.f32.mxu0 0.0
        %v537 = vand.u32 %v175, 4294901760
        %v538 = vsub.f32 %v175, %v537
        %539 = vmatmul.mubr.f32.gmra.mrb[0].mxu0 %v538
        %v540 = vpop.f32.mrb[0].mxu0
        %v541 = vadd.f32 %v437, %v540
        %v542 = vpop.f32.mrb[0].mxu0
        %543 = vdwg.mxu0
        %544 = vmatprep.subr.mxu0 0.0
        %v545 = vand.u32 %v177, 4294901760
        %546 = vmatpush1.msra.mxu0 %v545
        %547 = vmatprep.subr.mxu0 0.0
        %v548 = vand.u32 %v178, 4294901760
        %549 = vmatpush1.msra.mxu0 %v548
        %550 = vmatprep.subr.mxu0 0.0
        %v551 = vand.u32 %v179, 4294901760
        %552 = vmatpush1.msra.mxu0 %v551
        %553 = vmatprep.subr.mxu0 0.0
        %v554 = vand.u32 %v180, 4294901760
        %555 = vmatpush1.msra.mxu0 %v554
        %556 = vmatprep.subr.mxu0 0.0
        %v557 = vand.u32 %v181, 4294901760
        %558 = vmatpush1.msra.mxu0 %v557
        %559 = vmatprep.subr.mxu0 0.0
        %v560 = vand.u32 %v182, 4294901760
        %561 = vmatpush1.msra.mxu0 %v560
        %562 = vmatprep.subr.mxu0 0.0
        %v563 = vand.u32 %v183, 4294901760
        %564 = vmatpush1.msra.mxu0 %v563
        %565 = vmatprep.subr.mxu0 0.0
        %v566 = vand.u32 %v184, 4294901760
        %567 = vmatpush1.msra.mxu0 %v566
        %568 = vmatprep.subr.mxu0 0.0
        %v569 = vand.u32 %v185, 4294901760
        %570 = vmatpush1.msra.mxu0 %v569
        %571 = vmatprep.subr.mxu0 0.0
        %v572 = vand.u32 %v186, 4294901760
        %573 = vmatpush1.msra.mxu0 %v572
        %574 = vmatprep.subr.mxu0 0.0
        %v575 = vand.u32 %v187, 4294901760
        %576 = vmatpush1.msra.mxu0 %v575
        %577 = vmatprep.subr.mxu0 0.0
        %v578 = vand.u32 %v188, 4294901760
        %579 = vmatpush1.msra.mxu0 %v578
        %580 = vmatprep.subr.mxu0 0.0
        %v581 = vand.u32 %v189, 4294901760
        %582 = vmatpush1.msra.mxu0 %v581
        %583 = vmatprep.subr.mxu0 0.0
        %v584 = vand.u32 %v190, 4294901760
        %585 = vmatpush1.msra.mxu0 %v584
        %586 = vmatprep.subr.mxu0 0.0
        %v587 = vand.u32 %v191, 4294901760
        %588 = vmatpush1.msra.mxu0 %v587
        %589 = vmatprep.subr.mxu0 0.0
        %v590 = vand.u32 %v192, 4294901760
        %591 = vmatpush1.msra.mxu0 %v590
        %592 = vmatprep.subr.mxu0 0.0
        %593 = vmatpush1.msra.mxu0 0.0
        %594 = vmatprep.subr.mxu0 0.0
        %595 = vmatpush1.msra.mxu0 0.0
        %596 = vmatprep.subr.mxu0 0.0
        %597 = vmatpush1.msra.mxu0 0.0
        %598 = vmatprep.subr.mxu0 0.0
        %599 = vmatpush1.msra.mxu0 0.0
        %600 = vmatprep.subr.mxu0 0.0
        %601 = vmatpush1.msra.mxu0 0.0
        %602 = vmatprep.subr.mxu0 0.0
        %603 = vmatpush1.msra.mxu0 0.0
        %604 = vmatprep.subr.mxu0 0.0
        %605 = vmatpush1.msra.mxu0 0.0
        %606 = vmatprep.subr.mxu0 0.0
        %607 = vmatpush1.msra.mxu0 0.0
        %608 = vmatprep.subr.mxu0 0.0
        %609 = vmatpush1.msra.mxu0 0.0
        %610 = vmatprep.subr.mxu0 0.0
        %611 = vmatpush1.msra.mxu0 0.0
        %612 = vmatprep.subr.mxu0 0.0
        %613 = vmatpush1.msra.mxu0 0.0
        %614 = vmatprep.subr.mxu0 0.0
        %615 = vmatpush1.msra.mxu0 0.0
        %616 = vmatprep.subr.mxu0 0.0
        %617 = vmatpush1.msra.mxu0 0.0
        %618 = vmatprep.subr.mxu0 0.0
        %619 = vmatpush1.msra.mxu0 0.0
        %620 = vmatprep.subr.mxu0 0.0
        %621 = vmatpush1.msra.mxu0 0.0
        %622 = vmatprep.subr.mxu0 0.0
        %623 = vmatpush1.msra.mxu0 0.0
        %624 = vmatprep.mubr.f32.mxu0 0.0
        %v625 = vand.u32 %v175, 4294901760
        %v626 = vsub.f32 %v175, %v625
        %v627 = vand.u32 %v626, 4294901760
        %628 = vmatmul.mubr.f32.gmra.mrb[0].mxu0 %v627
        %v629 = vpop.f32.mrb[0].mxu0
        %v630 = vadd.f32 %v541, %v629
        %v631 = vpop.f32.mrb[0].mxu0
        %632 = vdwg.mxu0
        %633 = vmatprep.subr.mxu0 0.0
        %v634 = vand.u32 %v177, 4294901760
        %v635 = vsub.f32 %v177, %v634
        %v636 = vand.u32 %v635, 4294901760
        %637 = vmatpush1.msra.mxu0 %v636
        %638 = vmatprep.subr.mxu0 0.0
        %v639 = vand.u32 %v178, 4294901760
        %v640 = vsub.f32 %v178, %v639
        %v641 = vand.u32 %v640, 4294901760
        %642 = vmatpush1.msra.mxu0 %v641
        %643 = vmatprep.subr.mxu0 0.0
        %v644 = vand.u32 %v179, 4294901760
        %v645 = vsub.f32 %v179, %v644
        %v646 = vand.u32 %v645, 4294901760
        %647 = vmatpush1.msra.mxu0 %v646
        %648 = vmatprep.subr.mxu0 0.0
        %v649 = vand.u32 %v180, 4294901760
        %v650 = vsub.f32 %v180, %v649
        %v651 = vand.u32 %v650, 4294901760
        %652 = vmatpush1.msra.mxu0 %v651
        %653 = vmatprep.subr.mxu0 0.0
        %v654 = vand.u32 %v181, 4294901760
        %v655 = vsub.f32 %v181, %v654
        %v656 = vand.u32 %v655, 4294901760
        %657 = vmatpush1.msra.mxu0 %v656
        %658 = vmatprep.subr.mxu0 0.0
        %v659 = vand.u32 %v182, 4294901760
        %v660 = vsub.f32 %v182, %v659
        %v661 = vand.u32 %v660, 4294901760
        %662 = vmatpush1.msra.mxu0 %v661
        %663 = vmatprep.subr.mxu0 0.0
        %v664 = vand.u32 %v183, 4294901760
        %v665 = vsub.f32 %v183, %v664
        %v666 = vand.u32 %v665, 4294901760
        %667 = vmatpush1.msra.mxu0 %v666
        %668 = vmatprep.subr.mxu0 0.0
        %v669 = vand.u32 %v184, 4294901760
        %v670 = vsub.f32 %v184, %v669
        %v671 = vand.u32 %v670, 4294901760
        %672 = vmatpush1.msra.mxu0 %v671
        %673 = vmatprep.subr.mxu0 0.0
        %v674 = vand.u32 %v185, 4294901760
        %v675 = vsub.f32 %v185, %v674
        %v676 = vand.u32 %v675, 4294901760
        %677 = vmatpush1.msra.mxu0 %v676
        %678 = vmatprep.subr.mxu0 0.0
        %v679 = vand.u32 %v186, 4294901760
        %v680 = vsub.f32 %v186, %v679
        %v681 = vand.u32 %v680, 4294901760
        %682 = vmatpush1.msra.mxu0 %v681
        %683 = vmatprep.subr.mxu0 0.0
        %v684 = vand.u32 %v187, 4294901760
        %v685 = vsub.f32 %v187, %v684
        %v686 = vand.u32 %v685, 4294901760
        %687 = vmatpush1.msra.mxu0 %v686
        %688 = vmatprep.subr.mxu0 0.0
        %v689 = vand.u32 %v188, 4294901760
        %v690 = vsub.f32 %v188, %v689
        %v691 = vand.u32 %v690, 4294901760
        %692 = vmatpush1.msra.mxu0 %v691
        %693 = vmatprep.subr.mxu0 0.0
        %v694 = vand.u32 %v189, 4294901760
        %v695 = vsub.f32 %v189, %v694
        %v696 = vand.u32 %v695, 4294901760
        %697 = vmatpush1.msra.mxu0 %v696
        %698 = vmatprep.subr.mxu0 0.0
        %v699 = vand.u32 %v190, 4294901760
        %v700 = vsub.f32 %v190, %v699
        %v701 = vand.u32 %v700, 4294901760
        %702 = vmatpush1.msra.mxu0 %v701
        %703 = vmatprep.subr.mxu0 0.0
        %v704 = vand.u32 %v191, 4294901760
        %v705 = vsub.f32 %v191, %v704
        %v706 = vand.u32 %v705, 4294901760
        %707 = vmatpush1.msra.mxu0 %v706
        %708 = vmatprep.subr.mxu0 0.0
        %v709 = vand.u32 %v192, 4294901760
        %v710 = vsub.f32 %v192, %v709
        %v711 = vand.u32 %v710, 4294901760
        %712 = vmatpush1.msra.mxu0 %v711
        %713 = vmatprep.subr.mxu0 0.0
        %714 = vmatpush1.msra.mxu0 0.0
        %715 = vmatprep.subr.mxu0 0.0
        %716 = vmatpush1.msra.mxu0 0.0
        %717 = vmatprep.subr.mxu0 0.0
        %718 = vmatpush1.msra.mxu0 0.0
        %719 = vmatprep.subr.mxu0 0.0
        %720 = vmatpush1.msra.mxu0 0.0
        %721 = vmatprep.subr.mxu0 0.0
        %722 = vmatpush1.msra.mxu0 0.0
        %723 = vmatprep.subr.mxu0 0.0
        %724 = vmatpush1.msra.mxu0 0.0
        %725 = vmatprep.subr.mxu0 0.0
        %726 = vmatpush1.msra.mxu0 0.0
        %727 = vmatprep.subr.mxu0 0.0
        %728 = vmatpush1.msra.mxu0 0.0
        %729 = vmatprep.subr.mxu0 0.0
        %730 = vmatpush1.msra.mxu0 0.0
        %731 = vmatprep.subr.mxu0 0.0
        %732 = vmatpush1.msra.mxu0 0.0
        %733 = vmatprep.subr.mxu0 0.0
        %734 = vmatpush1.msra.mxu0 0.0
        %735 = vmatprep.subr.mxu0 0.0
        %736 = vmatpush1.msra.mxu0 0.0
        %737 = vmatprep.subr.mxu0 0.0
        %738 = vmatpush1.msra.mxu0 0.0
        %739 = vmatprep.subr.mxu0 0.0
        %740 = vmatpush1.msra.mxu0 0.0
        %741 = vmatprep.subr.mxu0 0.0
        %742 = vmatpush1.msra.mxu0 0.0
        %743 = vmatprep.subr.mxu0 0.0
        %744 = vmatpush1.msra.mxu0 0.0
        %745 = vmatprep.mubr.f32.mxu0 0.0
        %v746 = vand.u32 %v175, 4294901760
        %747 = vmatmul.mubr.f32.gmra.mrb[0].mxu0 %v746
        %v748 = vpop.f32.mrb[0].mxu0
        %v749 = vadd.f32 %v630, %v748
        %v750 = vpop.f32.mrb[0].mxu0
        %751 = vdwg.mxu0
        %752 = vmatprep.subr.mxu0 0.0
        %v753 = vand.u32 %v177, 4294901760
        %754 = vmatpush1.msra.mxu0 %v753
        %755 = vmatprep.subr.mxu0 0.0
        %v756 = vand.u32 %v178, 4294901760
        %757 = vmatpush1.msra.mxu0 %v756
        %758 = vmatprep.subr.mxu0 0.0
        %v759 = vand.u32 %v179, 4294901760
        %760 = vmatpush1.msra.mxu0 %v759
        %761 = vmatprep.subr.mxu0 0.0
        %v762 = vand.u32 %v180, 4294901760
        %763 = vmatpush1.msra.mxu0 %v762
        %764 = vmatprep.subr.mxu0 0.0
        %v765 = vand.u32 %v181, 4294901760
        %766 = vmatpush1.msra.mxu0 %v765
        %767 = vmatprep.subr.mxu0 0.0
        %v768 = vand.u32 %v182, 4294901760
        %769 = vmatpush1.msra.mxu0 %v768
        %770 = vmatprep.subr.mxu0 0.0
        %v771 = vand.u32 %v183, 4294901760
        %772 = vmatpush1.msra.mxu0 %v771
        %773 = vmatprep.subr.mxu0 0.0
        %v774 = vand.u32 %v184, 4294901760
        %775 = vmatpush1.msra.mxu0 %v774
        %776 = vmatprep.subr.mxu0 0.0
        %v777 = vand.u32 %v185, 4294901760
        %778 = vmatpush1.msra.mxu0 %v777
        %779 = vmatprep.subr.mxu0 0.0
        %v780 = vand.u32 %v186, 4294901760
        %781 = vmatpush1.msra.mxu0 %v780
        %782 = vmatprep.subr.mxu0 0.0
        %v783 = vand.u32 %v187, 4294901760
        %784 = vmatpush1.msra.mxu0 %v783
        %785 = vmatprep.subr.mxu0 0.0
        %v786 = vand.u32 %v188, 4294901760
        %787 = vmatpush1.msra.mxu0 %v786
        %788 = vmatprep.subr.mxu0 0.0
        %v789 = vand.u32 %v189, 4294901760
        %790 = vmatpush1.msra.mxu0 %v789
        %791 = vmatprep.subr.mxu0 0.0
        %v792 = vand.u32 %v190, 4294901760
        %793 = vmatpush1.msra.mxu0 %v792
        %794 = vmatprep.subr.mxu0 0.0
        %v795 = vand.u32 %v191, 4294901760
        %796 = vmatpush1.msra.mxu0 %v795
        %797 = vmatprep.subr.mxu0 0.0
        %v798 = vand.u32 %v192, 4294901760
        %799 = vmatpush1.msra.mxu0 %v798
        %800 = vmatprep.subr.mxu0 0.0
        %801 = vmatpush1.msra.mxu0 0.0
        %802 = vmatprep.subr.mxu0 0.0
        %803 = vmatpush1.msra.mxu0 0.0
        %804 = vmatprep.subr.mxu0 0.0
        %805 = vmatpush1.msra.mxu0 0.0
        %806 = vmatprep.subr.mxu0 0.0
        %807 = vmatpush1.msra.mxu0 0.0
        %808 = vmatprep.subr.mxu0 0.0
        %809 = vmatpush1.msra.mxu0 0.0
        %810 = vmatprep.subr.mxu0 0.0
        %811 = vmatpush1.msra.mxu0 0.0
        %812 = vmatprep.subr.mxu0 0.0
        %813 = vmatpush1.msra.mxu0 0.0
        %814 = vmatprep.subr.mxu0 0.0
        %815 = vmatpush1.msra.mxu0 0.0
        %816 = vmatprep.subr.mxu0 0.0
        %817 = vmatpush1.msra.mxu0 0.0
        %818 = vmatprep.subr.mxu0 0.0
        %819 = vmatpush1.msra.mxu0 0.0
        %820 = vmatprep.subr.mxu0 0.0
        %821 = vmatpush1.msra.mxu0 0.0
        %822 = vmatprep.subr.mxu0 0.0
        %823 = vmatpush1.msra.mxu0 0.0
        %824 = vmatprep.subr.mxu0 0.0
        %825 = vmatpush1.msra.mxu0 0.0
        %826 = vmatprep.subr.mxu0 0.0
        %827 = vmatpush1.msra.mxu0 0.0
        %828 = vmatprep.subr.mxu0 0.0
        %829 = vmatpush1.msra.mxu0 0.0
        %830 = vmatprep.subr.mxu0 0.0
        %831 = vmatpush1.msra.mxu0 0.0
        %832 = vmatprep.mubr.f32.mxu0 0.0
        %v833 = vand.u32 %v175, 4294901760
        %834 = vmatmul.mubr.f32.gmra.mrb[0].mxu0 %v833
        %v835 = vpop.f32.mrb[0].mxu0
        %v836 = vadd.f32 %v749, %v835
        %v837 = vpop.f32.mrb[0].mxu0
        %838 = vdwg.mxu0
        %v839 = vsub.f32 %v194, 1.0
        %v840 = vmul.f32 %v193, %v839
        %v841 = vadd.f32 %v840, %v176
        %v842 = vmul.f32 %v841, -0.01
        %843 = vst [vmem:[%s174] sm:$0xff] %v836
        %844 = vst [vmem:[%s174 + $0x8] sm:$0xff] %v842
        %s845 = sand.u32 %s75, 1
        %s846 = scalar_lea.sflag [#allocation4], %s845
        %s847 = sand.u32 %s75, 1
        %s848 = smul.addr %s847, 16
        %s849 = scalar_lea.vmem [#allocation7], %s848
        // Predicated region
        $region37: #{tpu_custom_call.1} parent=27 // pred_check
          %p850 = pneg %p85
        $region38: #{tpu_custom_call.1} parent=27 // pred_check_branch
          %852 = sbr.rel (%p850) target = $region40
        $region39: #{tpu_custom_call.1} parent=27 // pred_region
          %s854 = ssub.s32 256, 256
          %855 = vsyncadd %s846, %s854
          %s856 = smul.addr %s20, 2
          %s857 = smul.addr %s856, 128
          %s858 = scalar_lea.hbm %s2, %s857
          %s860 = sshll.u32 %s849, 4
          %s861 = int_to_ptr.vmem [resolvable:$true] %s860
          %863 = dma.vmem_to_hbm [thread:$0]  %s861, 256, %s858, %s846
        $region40: #{tpu_custom_call.1} parent=27 // pred_fallthru
          _
      $region28: #{tpu_custom_call.1} parent=5 // pred_fallthru
        _
      %p864 = scmp.le.s32.totalorder 2, %s15
      // Predicated region
      $region41: #{tpu_custom_call.1} parent=5 // pred_check
        %p865 = pneg %p864
      $region42: #{tpu_custom_call.1} parent=5 // pred_check_branch
        %867 = sbr.rel (%p865) target = $region44
      $region43: #{tpu_custom_call.1} parent=5 // pred_region
        %s868 = ssub.s32 %s15, 2
        // Predicated region
        $region45: #{tpu_custom_call.1} parent=43 // pred_check
          %p869 = pneg %p91
        $region46: #{tpu_custom_call.1} parent=43 // pred_check_branch
          %871 = sbr.rel (%p869) target = $region48
        $region47: #{tpu_custom_call.1} parent=43 // pred_region
          %s872 = sand.u32 %s76, 1
          %s873 = scalar_lea.sflag [#allocation4], %s872
          %s874 = sand.u32 %s76, 1
          %s875 = smul.addr %s874, 16
          %s876 = scalar_lea.vmem [#allocation7], %s875
          %877 = dma.done %s873, 256
        $region48: #{tpu_custom_call.1} parent=43 // pred_fallthru
          _
      $region44: #{tpu_custom_call.1} parent=5 // pred_fallthru
        _
    $region6: #{tpu_custom_call.1} parent=1 // loop_footer
      %s19 = sadd.s32 1, %s15
    $region7: #{tpu_custom_call.1} parent=1 // loop_footer_branch
      %14 = sbr.rel target = $region3
    $region8: #{tpu_custom_call.1} parent=1 // loop_exit
      _
    %878 = vsyncpa [#allocation3], 1
    %s879 = scalar_lea.sflag [#allocation3], 1
    %880 = vsyncpa %s879, 1
    %881 = vsyncpa [#allocation6], 1
    %882 = vsyncpa [#allocation4], 1
    %s883 = scalar_lea.sflag [#allocation4], 1
    %884 = vsyncpa %s883, 1

</llo_original>
